<compile_context>
chip_gen: v6e
topology: v6e:2x2x1
jax: 0.10.0
libtpu: 0.0.40
codegen_flags: <defaults>
</compile_context>

<pallas_src>
import functools
import math

import jax
import jax.numpy as jnp
from jax.experimental import pallas as pl
from jax.experimental.pallas import tpu as pltpu


def mha_kernel(x_ref, wqkv_ref, wp_ref, bp_ref, o_ref, acc_ref,
               *, num_heads, head_size, batch_block, seq_len):
    """One batch block of causal multi-head self-attention.

    x_ref    : (Bb*T, C)  bf16 activations (Bb batch rows flattened with time)
    wqkv_ref : (C, 3C)    fused [Wq*scale | Wk | Wv], pre-transposed to (in, out)
    wp_ref   : (C, C)     output-projection weight, pre-transposed
    bp_ref   : (1, C)     output-projection bias (f32)
    o_ref    : (Bb*T, C)  output (x dtype)
    acc_ref  : (Bb*T, C)  f32 VMEM scratch: per-head projection accumulator
    """
    H, hs, Bb, T = num_heads, head_size, batch_block, seq_len
    C = H * hs
    rows = Bb * T
    cdt = wqkv_ref.dtype                          # MXU input dtype (bf16)

    # Fused QKV projection (scale pre-folded into the Q weight); cast to bf16 right away
    # so the (rows, 3C) intermediate stays half-width.
    qkv = jnp.dot(x_ref[...], wqkv_ref[...],
                  preferred_element_type=jnp.float32).astype(cdt)

    # Causal mask as an additive bias, built once at (1, T, T) and broadcast over batch
    # (finite large-negative instead of -inf so masked rows can never produce NaNs).
    r = jax.lax.broadcasted_iota(jnp.int32, (1, T, T), 1)
    c = jax.lax.broadcasted_iota(jnp.int32, (1, T, T), 2)
    mask_bias = jnp.where(r >= c, 0.0, -1e30).astype(jnp.float32)

    # Per-head attention; each head's context is folded straight into the output
    # projection (acc += oh @ Wp[h*hs:(h+1)*hs, :]) so every VMEM store is a full
    # C-lane-wide (lane-dense) store -- no narrow per-head scratch writes.
    for h in range(H):                            # H is small & static; unrolled
        qh = qkv[:, 0 * C + h * hs:0 * C + (h + 1) * hs].reshape(Bb, T, hs)
        kh = qkv[:, 1 * C + h * hs:1 * C + (h + 1) * hs].reshape(Bb, T, hs)
        vh = qkv[:, 2 * C + h * hs:2 * C + (h + 1) * hs].reshape(Bb, T, hs)

        s = jnp.einsum('btd,bsd->bts', qh, kh,
                       preferred_element_type=jnp.float32)        # (Bb, T, T) f32
        s = s + mask_bias
        s = s - jnp.max(s, axis=-1, keepdims=True)                # stable softmax (f32)
        p = jnp.exp(s)
        p = p * pl.reciprocal(jnp.sum(p, axis=-1, keepdims=True), approx=True)

        oh = jnp.einsum('bts,bsd->btd', p.astype(cdt), vh,
                        preferred_element_type=jnp.float32)       # (Bb, T, hs) f32

        contrib = jnp.dot(oh.reshape(rows, hs).astype(cdt),
                          wp_ref[h * hs:(h + 1) * hs, :],
                          preferred_element_type=jnp.float32)     # (rows, C) f32
        if h == 0:
            acc_ref[...] = contrib
        else:
            acc_ref[...] += contrib

    o_ref[...] = (acc_ref[...] + bp_ref[...]).astype(o_ref.dtype)
    # TODO(synk): nn.Dropout omitted -- treated as eval-mode identity.
    # TODO(synk): at realistic T / d_model add flash-style KV tiling (extra 'arbitrary'
    # grid axis carrying m/l/acc) and a head-major relayout or head grid axis, so the
    # full (T, T) scores are never materialized and per-head sub-128-lane slices vanish.


def _chip_vmem_and_cores():
    """(tile-budget bytes, vmem_limit_bytes, TensorCores per chip) for the local TPU."""
    try:
        kind = jax.devices()[0].device_kind.lower()
    except Exception:
        kind = ""
    if "v7" in kind or "7x" in kind:
        phys, cores = 64 * 1024 * 1024, 2     # v7x: 64 MiB VMEM per TensorCore, 2 TCs
    else:
        phys, cores = 128 * 1024 * 1024, 1    # v5e / v6e: 128 MiB VMEM, 1 TC
    return int(phys * 0.70), int(phys * 0.85), cores


def _step_vmem_bytes(bb, T, C, H, out_itemsize):
    """Conservative per-grid-step VMEM estimate for a batch block of `bb` rows."""
    rows = bb * T
    b = 2 * rows * C * 2                      # x block, bf16, double-buffered
    b += 2 * rows * C * out_itemsize          # output block, double-buffered
    b += rows * 3 * C * (4 + 2)               # fused QKV: f32 accum peak + bf16 copy
    b += rows * C * 4                         # f32 projection accumulator scratch
    b += 3 * bb * T * T * 4                   # per-head score/prob transients (f32)
    b += 2 * T * T * 4                        # causal-mask bias + iotas
    b += 2 * (3 * C * C + C * C + C) * 2      # weights + bias (worst case: double-buffered)
    return b


def _pick_batch_block(B, T, C, H, out_itemsize, budget_bytes, num_cores):
    """Largest divisor of B that fits the VMEM budget, keeping >=2 steps per core if possible."""
    divisors = [d for d in range(1, B + 1) if B % d == 0]
    fits = [d for d in divisors if _step_vmem_bytes(d, T, C, H, out_itemsize) <= budget_bytes]
    if not fits:
        return 1
    for min_steps in (2 * num_cores, num_cores, 1):
        cand = [d for d in fits if (B // d) >= min_steps and (B // d) % num_cores == 0]
        if cand:
            return max(cand)
    return max(fits)


def multi_head_attention(x, wq_t, wk_t, wv_t, wp_t, bp, num_heads,
                         *, batch_block=None, compute_dtype=jnp.bfloat16):
    """x: (B, T, C); w*_t pre-transposed to (in, out); bp: (C,). Eval-mode (dropout=identity)."""
    B, T, C = x.shape
    assert C % num_heads == 0
    head_size = C // num_heads

    budget, vmem_limit, num_cores = _chip_vmem_and_cores()
    if batch_block is None:
        batch_block = _pick_batch_block(B, T, C, num_heads, x.dtype.itemsize,
                                        budget, num_cores)
    assert B % batch_block == 0
    grid_b = B // batch_block
    rows = batch_block * T

    # Fused QKV weight with the 1/sqrt(head_size) scale folded into the Q columns.
    scale = 1.0 / math.sqrt(head_size)
    wqkv = jnp.concatenate([wq_t * scale, wk_t, wv_t], axis=1).astype(compute_dtype)
    wp = wp_t.astype(compute_dtype)
    bp2 = bp.reshape(1, C).astype(jnp.float32)

    # Flatten batch x sequence so each grid step projects a (Bb*T, C) slab.
    x_flat = x.reshape(B * T, C).astype(compute_dtype)

    kernel = functools.partial(mha_kernel, num_heads=num_heads, head_size=head_size,
                               batch_block=batch_block, seq_len=T)

    def build(single_buffer_weights):
        wmode = {}
        if single_buffer_weights and hasattr(pl, "Buffered"):
            wmode = {"pipeline_mode": pl.Buffered(1)}     # grid-invariant: no double buffer
        return pl.pallas_call(
            kernel,
            out_shape=jax.ShapeDtypeStruct((B * T, C), x.dtype),
            grid=(grid_b,),
            in_specs=[
                pl.BlockSpec((rows, C), lambda i: (i, 0)),             # activations
                pl.BlockSpec((C, 3 * C), lambda i: (0, 0), **wmode),   # fused Wqkv
                pl.BlockSpec((C, C), lambda i: (0, 0), **wmode),       # Wproj
                pl.BlockSpec((1, C), lambda i: (0, 0), **wmode),       # proj bias
            ],
            out_specs=pl.BlockSpec((rows, C), lambda i: (i, 0)),
            scratch_shapes=[pltpu.VMEM((rows, C), jnp.float32)],       # f32 proj accumulator
            compiler_params=pltpu.CompilerParams(
                dimension_semantics=("parallel",),        # megacore sharding on v7x
                vmem_limit_bytes=vmem_limit),
        )

    try:
        out_flat = build(True)(x_flat, wqkv, wp, bp2)
    except Exception:
        # Pallas version without per-operand pipeline_mode: fall back to default buffering.
        out_flat = build(False)(x_flat, wqkv, wp, bp2)

    return out_flat.reshape(B, T, C)


def _reference_mha(x, wq_t, wk_t, wv_t, wp_t, bp, num_heads):
    """Pure-JAX f32 reference matching the PyTorch module (eval mode)."""
    B, T, C = x.shape
    hs = C // num_heads

    def heads(y):
        return jnp.transpose(y.reshape(B, T, num_heads, hs), (0, 2, 1, 3))

    q, k, v = heads(x @ wq_t), heads(x @ wk_t), heads(x @ wv_t)
    s = jnp.einsum('bhtd,bhsd->bhts', q, k) / math.sqrt(hs)
    mask = jnp.tril(jnp.ones((T, T), dtype=bool))
    s = jnp.where(mask, s, -jnp.inf)
    p = jax.nn.softmax(s, axis=-1)
    o = jnp.einsum('bhts,bhsd->bhtd', p, v)
    o = jnp.transpose(o, (0, 2, 1, 3)).reshape(B, T, C)
    return o @ wp_t + bp


if __name__ == "__main__":
    # Small shapes consistent with the module: B=2, T=8 (<= context_length),
    # d_model=32, num_heads=4, head_size=8.
    B, T = 2, 8
    d_model, num_heads = 32, 4

    key = jax.random.PRNGKey(0)
    kx, kq, kk, kv, kp, kb = jax.random.split(key, 6)

    bound = 1.0 / math.sqrt(d_model)   # ~ PyTorch Linear default init range
    x = jax.random.normal(kx, (B, T, d_model), dtype=jnp.float32)
    wq_t = jax.random.uniform(kq, (d_model, d_model), jnp.float32, -bound, bound)
    wk_t = jax.random.uniform(kk, (d_model, d_model), jnp.float32, -bound, bound)
    wv_t = jax.random.uniform(kv, (d_model, d_model), jnp.float32, -bound, bound)
    wp_t = jax.random.uniform(kp, (d_model, d_model), jnp.float32, -bound, bound)
    bp = jax.random.uniform(kb, (d_model,), jnp.float32, -bound, bound)

    out = multi_head_attention(x, wq_t, wk_t, wv_t, wp_t, bp, num_heads)
    out = jax.block_until_ready(out)
    assert out.shape == (B, T, d_model)

    # Loose tolerance: Q/K/V/P enter the MXU as bf16 (f32 accumulation) and the softmax
    # denominator uses the approximate EUP reciprocal.
    ref = _reference_mha(x, wq_t, wk_t, wv_t, wp_t, bp, num_heads)
    max_err = float(jnp.max(jnp.abs(out - ref)))
    assert max_err < 5e-2, max_err

    print("KERNEL_OK")
</pallas_src>

<mosaic_0001>
module attributes {stable_mosaic.version = 11 : i64} {
  func.func @mha_kernel(%arg0: i32, %arg1: memref<8x32xbf16, #tpu.memory_space<vmem>>, %arg2: memref<32x96xbf16, #tpu.memory_space<vmem>>, %arg3: memref<32x32xbf16, #tpu.memory_space<vmem>>, %arg4: memref<1x32xf32, #tpu.memory_space<vmem>>, %arg5: memref<8x32xf32, #tpu.memory_space<vmem>>, %arg6: memref<8x32xf32, #tpu.memory_space<vmem>>) attributes {dimension_semantics = [#tpu.dimension_semantics<parallel>], iteration_bounds = array<i64: 2>, scalar_prefetch = 0 : i64, scratch_operands = 1 : i64, tpu.core_type = #tpu.core_type<tc>, window_params = [{transform_indices = @transform_0, window_bounds = array<i64: 8, 32>}, {pipeline_mode = #tpu.pipeline_mode<synchronous>, transform_indices = @transform_1, window_bounds = array<i64: 32, 96>}, {pipeline_mode = #tpu.pipeline_mode<synchronous>, transform_indices = @transform_2, window_bounds = array<i64: 32, 32>}, {pipeline_mode = #tpu.pipeline_mode<synchronous>, transform_indices = @transform_3, window_bounds = array<i64: 1, 32>}, {transform_indices = @transform_4, window_bounds = array<i64: 8, 32>}]} {
    %c0 = arith.constant 0 : index
    %c0_0 = arith.constant 0 : index
    %0 = vector.load %arg1[%c0, %c0_0] : memref<8x32xbf16, #tpu.memory_space<vmem>>, vector<8x32xbf16>
    %c0_1 = arith.constant 0 : index
    %c0_2 = arith.constant 0 : index
    %1 = vector.load %arg2[%c0_1, %c0_2] : memref<32x96xbf16, #tpu.memory_space<vmem>>, vector<32x96xbf16>
    %cst = arith.constant dense<0.000000e+00> : vector<8x96xf32>
    %2 = tpu.matmul %0, %1, %cst {dimension_numbers = #tpu.dot_dimension_numbers<[1], [0], [0], [1], [0, 0, 1, 1], [], []>} : vector<8x32xbf16>, vector<32x96xbf16>, vector<8x96xf32> -> vector<8x96xf32>
    %3 = arith.truncf %2 : vector<8x96xf32> to vector<8x96xbf16>
    %4 = tpu.iota {dimensions = array<i32: 1>} : vector<1x8x8xi32>
    %5 = tpu.iota {dimensions = array<i32: 2>} : vector<1x8x8xi32>
    %6 = arith.cmpi sge, %4, %5 : vector<1x8x8xi32>
    %cst_3 = arith.constant 0.000000e+00 : f32
    %cst_4 = arith.constant -1.000000e+30 : f32
    %7 = vector.broadcast %cst_3 : f32 to vector<1x8x8xf32>
    %8 = vector.broadcast %cst_4 : f32 to vector<1x8x8xf32>
    %9 = arith.select %6, %7, %8 : vector<1x8x8xi1>, vector<1x8x8xf32>
    %10 = vector.extract_strided_slice %3 {offsets = [0, 0], sizes = [8, 8], strides = [1, 1]} : vector<8x96xbf16> to vector<8x8xbf16>
    %11 = vector.shape_cast %10 : vector<8x8xbf16> to vector<1x8x8xbf16>
    %12 = vector.extract_strided_slice %3 {offsets = [0, 32], sizes = [8, 8], strides = [1, 1]} : vector<8x96xbf16> to vector<8x8xbf16>
    %13 = vector.shape_cast %12 : vector<8x8xbf16> to vector<1x8x8xbf16>
    %14 = vector.extract_strided_slice %3 {offsets = [0, 64], sizes = [8, 8], strides = [1, 1]} : vector<8x96xbf16> to vector<8x8xbf16>
    %15 = vector.shape_cast %14 : vector<8x8xbf16> to vector<1x8x8xbf16>
    "tpu.trace_start"() <{level = 10 : i32, message = "btd,bsd->bts"}> : () -> ()
    %cst_5 = arith.constant dense<0.000000e+00> : vector<1x8x8xf32>
    %16 = tpu.matmul %11, %13, %cst_5 {dimension_numbers = #tpu.dot_dimension_numbers<[2], [2], [1], [1], [0, 0, 0, 1, 1, 1], [0], [0]>} : vector<1x8x8xbf16>, vector<1x8x8xbf16>, vector<1x8x8xf32> -> vector<1x8x8xf32>
    "tpu.trace_stop"() : () -> ()
    %17 = arith.addf %16, %9 : vector<1x8x8xf32>
    %cst_6 = arith.constant dense<0xFF800000> : vector<1x8xf32>
    %18 = vector.multi_reduction <maximumf>, %17, %cst_6 [2] : vector<1x8x8xf32> to vector<1x8xf32>
    %19 = vector.shape_cast %18 : vector<1x8xf32> to vector<1x8x1xf32>
    %20 = vector.broadcast %19 : vector<1x8x1xf32> to vector<1x8x8xf32>
    %21 = arith.subf %17, %20 : vector<1x8x8xf32>
    %22 = math.exp %21 : vector<1x8x8xf32>
    %cst_7 = arith.constant dense<0.000000e+00> : vector<1x8xf32>
    %23 = vector.multi_reduction <add>, %22, %cst_7 [2] : vector<1x8x8xf32> to vector<1x8xf32>
    %24 = vector.shape_cast %23 : vector<1x8xf32> to vector<1x8x1xf32>
    %25 = tpu.reciprocal %24 {approx = true} : vector<1x8x1xf32> -> vector<1x8x1xf32>
    %26 = vector.broadcast %25 : vector<1x8x1xf32> to vector<1x8x8xf32>
    %27 = arith.mulf %22, %26 : vector<1x8x8xf32>
    %28 = arith.truncf %27 : vector<1x8x8xf32> to vector<1x8x8xbf16>
    "tpu.trace_start"() <{level = 10 : i32, message = "bts,bsd->btd"}> : () -> ()
    %cst_8 = arith.constant dense<0.000000e+00> : vector<1x8x8xf32>
    %29 = tpu.matmul %28, %15, %cst_8 {dimension_numbers = #tpu.dot_dimension_numbers<[2], [1], [1], [2], [0, 0, 0, 1, 1, 2], [0], [0]>} : vector<1x8x8xbf16>, vector<1x8x8xbf16>, vector<1x8x8xf32> -> vector<1x8x8xf32>
    "tpu.trace_stop"() : () -> ()
    %30 = vector.shape_cast %29 : vector<1x8x8xf32> to vector<8x8xf32>
    %31 = arith.truncf %30 : vector<8x8xf32> to vector<8x8xbf16>
    %c0_9 = arith.constant 0 : index
    %c0_10 = arith.constant 0 : index
    %32 = vector.load %arg3[%c0_9, %c0_10] : memref<32x32xbf16, #tpu.memory_space<vmem>>, vector<8x32xbf16>
    %cst_11 = arith.constant dense<0.000000e+00> : vector<8x32xf32>
    %33 = tpu.matmul %31, %32, %cst_11 {dimension_numbers = #tpu.dot_dimension_numbers<[1], [0], [0], [1], [0, 0, 1, 1], [], []>} : vector<8x8xbf16>, vector<8x32xbf16>, vector<8x32xf32> -> vector<8x32xf32>
    %c0_12 = arith.constant 0 : index
    %c0_13 = arith.constant 0 : index
    %34 = vector.load %arg6[%c0_12, %c0_13] : memref<8x32xf32, #tpu.memory_space<vmem>>, vector<8x32xf32>
    tpu.vector_store %arg6[%c0_12, %c0_13], %33 {strides = array<i32>} : memref<8x32xf32, #tpu.memory_space<vmem>>, vector<8x32xf32>,
    %35 = vector.extract_strided_slice %3 {offsets = [0, 8], sizes = [8, 8], strides = [1, 1]} : vector<8x96xbf16> to vector<8x8xbf16>
    %36 = vector.shape_cast %35 : vector<8x8xbf16> to vector<1x8x8xbf16>
    %37 = vector.extract_strided_slice %3 {offsets = [0, 40], sizes = [8, 8], strides = [1, 1]} : vector<8x96xbf16> to vector<8x8xbf16>
    %38 = vector.shape_cast %37 : vector<8x8xbf16> to vector<1x8x8xbf16>
    %39 = vector.extract_strided_slice %3 {offsets = [0, 72], sizes = [8, 8], strides = [1, 1]} : vector<8x96xbf16> to vector<8x8xbf16>
    %40 = vector.shape_cast %39 : vector<8x8xbf16> to vector<1x8x8xbf16>
    "tpu.trace_start"() <{level = 10 : i32, message = "btd,bsd->bts"}> : () -> ()
    %cst_14 = arith.constant dense<0.000000e+00> : vector<1x8x8xf32>
    %41 = tpu.matmul %36, %38, %cst_14 {dimension_numbers = #tpu.dot_dimension_numbers<[2], [2], [1], [1], [0, 0, 0, 1, 1, 1], [0], [0]>} : vector<1x8x8xbf16>, vector<1x8x8xbf16>, vector<1x8x8xf32> -> vector<1x8x8xf32>
    "tpu.trace_stop"() : () -> ()
    %42 = arith.addf %41, %9 : vector<1x8x8xf32>
    %cst_15 = arith.constant dense<0xFF800000> : vector<1x8xf32>
    %43 = vector.multi_reduction <maximumf>, %42, %cst_15 [2] : vector<1x8x8xf32> to vector<1x8xf32>
    %44 = vector.shape_cast %43 : vector<1x8xf32> to vector<1x8x1xf32>
    %45 = vector.broadcast %44 : vector<1x8x1xf32> to vector<1x8x8xf32>
    %46 = arith.subf %42, %45 : vector<1x8x8xf32>
    %47 = math.exp %46 : vector<1x8x8xf32>
    %cst_16 = arith.constant dense<0.000000e+00> : vector<1x8xf32>
    %48 = vector.multi_reduction <add>, %47, %cst_16 [2] : vector<1x8x8xf32> to vector<1x8xf32>
    %49 = vector.shape_cast %48 : vector<1x8xf32> to vector<1x8x1xf32>
    %50 = tpu.reciprocal %49 {approx = true} : vector<1x8x1xf32> -> vector<1x8x1xf32>
    %51 = vector.broadcast %50 : vector<1x8x1xf32> to vector<1x8x8xf32>
    %52 = arith.mulf %47, %51 : vector<1x8x8xf32>
    %53 = arith.truncf %52 : vector<1x8x8xf32> to vector<1x8x8xbf16>
    "tpu.trace_start"() <{level = 10 : i32, message = "bts,bsd->btd"}> : () -> ()
    %cst_17 = arith.constant dense<0.000000e+00> : vector<1x8x8xf32>
    %54 = tpu.matmul %53, %40, %cst_17 {dimension_numbers = #tpu.dot_dimension_numbers<[2], [1], [1], [2], [0, 0, 0, 1, 1, 2], [0], [0]>} : vector<1x8x8xbf16>, vector<1x8x8xbf16>, vector<1x8x8xf32> -> vector<1x8x8xf32>
    "tpu.trace_stop"() : () -> ()
    %55 = vector.shape_cast %54 : vector<1x8x8xf32> to vector<8x8xf32>
    %56 = arith.truncf %55 : vector<8x8xf32> to vector<8x8xbf16>
    %c8 = arith.constant 8 : index
    %c0_18 = arith.constant 0 : index
    %57 = vector.load %arg3[%c8, %c0_18] : memref<32x32xbf16, #tpu.memory_space<vmem>>, vector<8x32xbf16>
    %cst_19 = arith.constant dense<0.000000e+00> : vector<8x32xf32>
    %58 = tpu.matmul %56, %57, %cst_19 {dimension_numbers = #tpu.dot_dimension_numbers<[1], [0], [0], [1], [0, 0, 1, 1], [], []>} : vector<8x8xbf16>, vector<8x32xbf16>, vector<8x32xf32> -> vector<8x32xf32>
    %c0_20 = arith.constant 0 : index
    %c0_21 = arith.constant 0 : index
    %59 = vector.load %arg6[%c0_20, %c0_21] : memref<8x32xf32, #tpu.memory_space<vmem>>, vector<8x32xf32>
    %60 = arith.addf %59, %58 : vector<8x32xf32>
    %c0_22 = arith.constant 0 : index
    %c0_23 = arith.constant 0 : index
    %61 = vector.load %arg6[%c0_22, %c0_23] : memref<8x32xf32, #tpu.memory_space<vmem>>, vector<8x32xf32>
    tpu.vector_store %arg6[%c0_22, %c0_23], %60 {strides = array<i32>} : memref<8x32xf32, #tpu.memory_space<vmem>>, vector<8x32xf32>,
    %62 = vector.extract_strided_slice %3 {offsets = [0, 16], sizes = [8, 8], strides = [1, 1]} : vector<8x96xbf16> to vector<8x8xbf16>
    %63 = vector.shape_cast %62 : vector<8x8xbf16> to vector<1x8x8xbf16>
    %64 = vector.extract_strided_slice %3 {offsets = [0, 48], sizes = [8, 8], strides = [1, 1]} : vector<8x96xbf16> to vector<8x8xbf16>
    %65 = vector.shape_cast %64 : vector<8x8xbf16> to vector<1x8x8xbf16>
    %66 = vector.extract_strided_slice %3 {offsets = [0, 80], sizes = [8, 8], strides = [1, 1]} : vector<8x96xbf16> to vector<8x8xbf16>
    %67 = vector.shape_cast %66 : vector<8x8xbf16> to vector<1x8x8xbf16>
    "tpu.trace_start"() <{level = 10 : i32, message = "btd,bsd->bts"}> : () -> ()
    %cst_24 = arith.constant dense<0.000000e+00> : vector<1x8x8xf32>
    %68 = tpu.matmul %63, %65, %cst_24 {dimension_numbers = #tpu.dot_dimension_numbers<[2], [2], [1], [1], [0, 0, 0, 1, 1, 1], [0], [0]>} : vector<1x8x8xbf16>, vector<1x8x8xbf16>, vector<1x8x8xf32> -> vector<1x8x8xf32>
    "tpu.trace_stop"() : () -> ()
    %69 = arith.addf %68, %9 : vector<1x8x8xf32>
    %cst_25 = arith.constant dense<0xFF800000> : vector<1x8xf32>
    %70 = vector.multi_reduction <maximumf>, %69, %cst_25 [2] : vector<1x8x8xf32> to vector<1x8xf32>
    %71 = vector.shape_cast %70 : vector<1x8xf32> to vector<1x8x1xf32>
    %72 = vector.broadcast %71 : vector<1x8x1xf32> to vector<1x8x8xf32>
    %73 = arith.subf %69, %72 : vector<1x8x8xf32>
    %74 = math.exp %73 : vector<1x8x8xf32>
    %cst_26 = arith.constant dense<0.000000e+00> : vector<1x8xf32>
    %75 = vector.multi_reduction <add>, %74, %cst_26 [2] : vector<1x8x8xf32> to vector<1x8xf32>
    %76 = vector.shape_cast %75 : vector<1x8xf32> to vector<1x8x1xf32>
    %77 = tpu.reciprocal %76 {approx = true} : vector<1x8x1xf32> -> vector<1x8x1xf32>
    %78 = vector.broadcast %77 : vector<1x8x1xf32> to vector<1x8x8xf32>
    %79 = arith.mulf %74, %78 : vector<1x8x8xf32>
    %80 = arith.truncf %79 : vector<1x8x8xf32> to vector<1x8x8xbf16>
    "tpu.trace_start"() <{level = 10 : i32, message = "bts,bsd->btd"}> : () -> ()
    %cst_27 = arith.constant dense<0.000000e+00> : vector<1x8x8xf32>
    %81 = tpu.matmul %80, %67, %cst_27 {dimension_numbers = #tpu.dot_dimension_numbers<[2], [1], [1], [2], [0, 0, 0, 1, 1, 2], [0], [0]>} : vector<1x8x8xbf16>, vector<1x8x8xbf16>, vector<1x8x8xf32> -> vector<1x8x8xf32>
    "tpu.trace_stop"() : () -> ()
    %82 = vector.shape_cast %81 : vector<1x8x8xf32> to vector<8x8xf32>
    %83 = arith.truncf %82 : vector<8x8xf32> to vector<8x8xbf16>
    %c16 = arith.constant 16 : index
    %c0_28 = arith.constant 0 : index
    %84 = vector.load %arg3[%c16, %c0_28] : memref<32x32xbf16, #tpu.memory_space<vmem>>, vector<8x32xbf16>
    %cst_29 = arith.constant dense<0.000000e+00> : vector<8x32xf32>
    %85 = tpu.matmul %83, %84, %cst_29 {dimension_numbers = #tpu.dot_dimension_numbers<[1], [0], [0], [1], [0, 0, 1, 1], [], []>} : vector<8x8xbf16>, vector<8x32xbf16>, vector<8x32xf32> -> vector<8x32xf32>
    %c0_30 = arith.constant 0 : index
    %c0_31 = arith.constant 0 : index
    %86 = vector.load %arg6[%c0_30, %c0_31] : memref<8x32xf32, #tpu.memory_space<vmem>>, vector<8x32xf32>
    %87 = arith.addf %86, %85 : vector<8x32xf32>
    %c0_32 = arith.constant 0 : index
    %c0_33 = arith.constant 0 : index
    %88 = vector.load %arg6[%c0_32, %c0_33] : memref<8x32xf32, #tpu.memory_space<vmem>>, vector<8x32xf32>
    tpu.vector_store %arg6[%c0_32, %c0_33], %87 {strides = array<i32>} : memref<8x32xf32, #tpu.memory_space<vmem>>, vector<8x32xf32>,
    %89 = vector.extract_strided_slice %3 {offsets = [0, 24], sizes = [8, 8], strides = [1, 1]} : vector<8x96xbf16> to vector<8x8xbf16>
    %90 = vector.shape_cast %89 : vector<8x8xbf16> to vector<1x8x8xbf16>
    %91 = vector.extract_strided_slice %3 {offsets = [0, 56], sizes = [8, 8], strides = [1, 1]} : vector<8x96xbf16> to vector<8x8xbf16>
    %92 = vector.shape_cast %91 : vector<8x8xbf16> to vector<1x8x8xbf16>
    %93 = vector.extract_strided_slice %3 {offsets = [0, 88], sizes = [8, 8], strides = [1, 1]} : vector<8x96xbf16> to vector<8x8xbf16>
    %94 = vector.shape_cast %93 : vector<8x8xbf16> to vector<1x8x8xbf16>
    "tpu.trace_start"() <{level = 10 : i32, message = "btd,bsd->bts"}> : () -> ()
    %cst_34 = arith.constant dense<0.000000e+00> : vector<1x8x8xf32>
    %95 = tpu.matmul %90, %92, %cst_34 {dimension_numbers = #tpu.dot_dimension_numbers<[2], [2], [1], [1], [0, 0, 0, 1, 1, 1], [0], [0]>} : vector<1x8x8xbf16>, vector<1x8x8xbf16>, vector<1x8x8xf32> -> vector<1x8x8xf32>
    "tpu.trace_stop"() : () -> ()
    %96 = arith.addf %95, %9 : vector<1x8x8xf32>
    %cst_35 = arith.constant dense<0xFF800000> : vector<1x8xf32>
    %97 = vector.multi_reduction <maximumf>, %96, %cst_35 [2] : vector<1x8x8xf32> to vector<1x8xf32>
    %98 = vector.shape_cast %97 : vector<1x8xf32> to vector<1x8x1xf32>
    %99 = vector.broadcast %98 : vector<1x8x1xf32> to vector<1x8x8xf32>
    %100 = arith.subf %96, %99 : vector<1x8x8xf32>
    %101 = math.exp %100 : vector<1x8x8xf32>
    %cst_36 = arith.constant dense<0.000000e+00> : vector<1x8xf32>
    %102 = vector.multi_reduction <add>, %101, %cst_36 [2] : vector<1x8x8xf32> to vector<1x8xf32>
    %103 = vector.shape_cast %102 : vector<1x8xf32> to vector<1x8x1xf32>
    %104 = tpu.reciprocal %103 {approx = true} : vector<1x8x1xf32> -> vector<1x8x1xf32>
    %105 = vector.broadcast %104 : vector<1x8x1xf32> to vector<1x8x8xf32>
    %106 = arith.mulf %101, %105 : vector<1x8x8xf32>
    %107 = arith.truncf %106 : vector<1x8x8xf32> to vector<1x8x8xbf16>
    "tpu.trace_start"() <{level = 10 : i32, message = "bts,bsd->btd"}> : () -> ()
    %cst_37 = arith.constant dense<0.000000e+00> : vector<1x8x8xf32>
    %108 = tpu.matmul %107, %94, %cst_37 {dimension_numbers = #tpu.dot_dimension_numbers<[2], [1], [1], [2], [0, 0, 0, 1, 1, 2], [0], [0]>} : vector<1x8x8xbf16>, vector<1x8x8xbf16>, vector<1x8x8xf32> -> vector<1x8x8xf32>
    "tpu.trace_stop"() : () -> ()
    %109 = vector.shape_cast %108 : vector<1x8x8xf32> to vector<8x8xf32>
    %110 = arith.truncf %109 : vector<8x8xf32> to vector<8x8xbf16>
    %c24 = arith.constant 24 : index
    %c0_38 = arith.constant 0 : index
    %111 = vector.load %arg3[%c24, %c0_38] : memref<32x32xbf16, #tpu.memory_space<vmem>>, vector<8x32xbf16>
    %cst_39 = arith.constant dense<0.000000e+00> : vector<8x32xf32>
    %112 = tpu.matmul %110, %111, %cst_39 {dimension_numbers = #tpu.dot_dimension_numbers<[1], [0], [0], [1], [0, 0, 1, 1], [], []>} : vector<8x8xbf16>, vector<8x32xbf16>, vector<8x32xf32> -> vector<8x32xf32>
    %c0_40 = arith.constant 0 : index
    %c0_41 = arith.constant 0 : index
    %113 = vector.load %arg6[%c0_40, %c0_41] : memref<8x32xf32, #tpu.memory_space<vmem>>, vector<8x32xf32>
    %114 = arith.addf %113, %112 : vector<8x32xf32>
    %c0_42 = arith.constant 0 : index
    %c0_43 = arith.constant 0 : index
    %115 = vector.load %arg6[%c0_42, %c0_43] : memref<8x32xf32, #tpu.memory_space<vmem>>, vector<8x32xf32>
    tpu.vector_store %arg6[%c0_42, %c0_43], %114 {strides = array<i32>} : memref<8x32xf32, #tpu.memory_space<vmem>>, vector<8x32xf32>,
    %c0_44 = arith.constant 0 : index
    %c0_45 = arith.constant 0 : index
    %116 = vector.load %arg6[%c0_44, %c0_45] : memref<8x32xf32, #tpu.memory_space<vmem>>, vector<8x32xf32>
    %c0_46 = arith.constant 0 : index
    %c0_47 = arith.constant 0 : index
    %117 = vector.load %arg4[%c0_46, %c0_47] : memref<1x32xf32, #tpu.memory_space<vmem>>, vector<1x32xf32>
    %118 = vector.broadcast %117 : vector<1x32xf32> to vector<8x32xf32>
    %119 = arith.addf %116, %118 : vector<8x32xf32>
    %c0_48 = arith.constant 0 : index
    %c0_49 = arith.constant 0 : index
    %120 = vector.load %arg5[%c0_48, %c0_49] : memref<8x32xf32, #tpu.memory_space<vmem>>, vector<8x32xf32>
    tpu.vector_store %arg5[%c0_48, %c0_49], %119 {strides = array<i32>} : memref<8x32xf32, #tpu.memory_space<vmem>>, vector<8x32xf32>,
    return
  }
  func.func @transform_0(%arg0: i32) -> (i32, i32) {
    %c0_i32 = arith.constant 0 : i32
    %c0_i32_0 = arith.constant 0 : i32
    return %arg0, %c0_i32 : i32, i32
  }
  func.func @transform_1(%arg0: i32) -> (i32, i32) {
    %c0_i32 = arith.constant 0 : i32
    %c0_i32_0 = arith.constant 0 : i32
    %c0_i32_1 = arith.constant 0 : i32
    return %c0_i32, %c0_i32_0 : i32, i32
  }
  func.func @transform_2(%arg0: i32) -> (i32, i32) {
    %c0_i32 = arith.constant 0 : i32
    %c0_i32_0 = arith.constant 0 : i32
    %c0_i32_1 = arith.constant 0 : i32
    return %c0_i32, %c0_i32_0 : i32, i32
  }
  func.func @transform_3(%arg0: i32) -> (i32, i32) {
    %c0_i32 = arith.constant 0 : i32
    %c0_i32_0 = arith.constant 0 : i32
    %c0_i32_1 = arith.constant 0 : i32
    return %c0_i32, %c0_i32_0 : i32, i32
  }
  func.func @transform_4(%arg0: i32) -> (i32, i32) {
    %c0_i32 = arith.constant 0 : i32
    %c0_i32_0 = arith.constant 0 : i32
    return %arg0, %c0_i32 : i32, i32
  }
}

module attributes {stable_mosaic.version = 11 : i64} {
  func.func @mha_kernel(%arg0: i32, %arg1: memref<8x32xbf16, #tpu.memory_space<vmem>>, %arg2: memref<32x96xbf16, #tpu.memory_space<vmem>>, %arg3: memref<32x32xbf16, #tpu.memory_space<vmem>>, %arg4: memref<1x32xf32, #tpu.memory_space<vmem>>, %arg5: memref<8x32xf32, #tpu.memory_space<vmem>>, %arg6: memref<8x32xf32, #tpu.memory_space<vmem>>) attributes {dimension_semantics = [#tpu.dimension_semantics<parallel>], iteration_bounds = array<i64: 2>, scalar_prefetch = 0 : i64, scratch_operands = 1 : i64, tpu.core_type = #tpu.core_type<tc>, window_params = [{transform_indices = @transform_0, window_bounds = array<i64: 8, 32>}, {pipeline_mode = #tpu.pipeline_mode<synchronous>, transform_indices = @transform_1, window_bounds = array<i64: 32, 96>}, {pipeline_mode = #tpu.pipeline_mode<synchronous>, transform_indices = @transform_2, window_bounds = array<i64: 32, 32>}, {pipeline_mode = #tpu.pipeline_mode<synchronous>, transform_indices = @transform_3, window_bounds = array<i64: 1, 32>}, {transform_indices = @transform_4, window_bounds = array<i64: 8, 32>}]} {
    %c0 = arith.constant 0 : index
    %c0_0 = arith.constant 0 : index
    %0 = vector.load %arg1[%c0, %c0_0] : memref<8x32xbf16, #tpu.memory_space<vmem>>, vector<8x32xbf16>
    %c0_1 = arith.constant 0 : index
    %c0_2 = arith.constant 0 : index
    %1 = vector.load %arg2[%c0_1, %c0_2] : memref<32x96xbf16, #tpu.memory_space<vmem>>, vector<32x96xbf16>
    %cst = arith.constant dense<0.000000e+00> : vector<8x96xf32>
    %2 = tpu.matmul %0, %1, %cst {dimension_numbers = #tpu.dot_dimension_numbers<[1], [0], [0], [1], [0, 0, 1, 1], [], []>} : vector<8x32xbf16>, vector<32x96xbf16>, vector<8x96xf32> -> vector<8x96xf32>
    %3 = arith.truncf %2 : vector<8x96xf32> to vector<8x96xbf16>
    %4 = tpu.iota {dimensions = array<i32: 1>} : vector<1x8x8xi32>
    %5 = tpu.iota {dimensions = array<i32: 2>} : vector<1x8x8xi32>
    %6 = arith.cmpi sge, %4, %5 : vector<1x8x8xi32>
    %cst_3 = arith.constant 0.000000e+00 : f32
    %cst_4 = arith.constant -1.000000e+30 : f32
    %7 = vector.broadcast %cst_3 : f32 to vector<1x8x8xf32>
    %8 = vector.broadcast %cst_4 : f32 to vector<1x8x8xf32>
    %9 = arith.select %6, %7, %8 : vector<1x8x8xi1>, vector<1x8x8xf32>
    %10 = vector.extract_strided_slice %3 {offsets = [0, 0], sizes = [8, 8], strides = [1, 1]} : vector<8x96xbf16> to vector<8x8xbf16>
    %11 = vector.shape_cast %10 : vector<8x8xbf16> to vector<1x8x8xbf16>
    %12 = vector.extract_strided_slice %3 {offsets = [0, 32], sizes = [8, 8], strides = [1, 1]} : vector<8x96xbf16> to vector<8x8xbf16>
    %13 = vector.shape_cast %12 : vector<8x8xbf16> to vector<1x8x8xbf16>
    %14 = vector.extract_strided_slice %3 {offsets = [0, 64], sizes = [8, 8], strides = [1, 1]} : vector<8x96xbf16> to vector<8x8xbf16>
    %15 = vector.shape_cast %14 : vector<8x8xbf16> to vector<1x8x8xbf16>
    "tpu.trace_start"() <{level = 10 : i32, message = "btd,bsd->bts"}> : () -> ()
    %cst_5 = arith.constant dense<0.000000e+00> : vector<1x8x8xf32>
    %16 = tpu.matmul %11, %13, %cst_5 {dimension_numbers = #tpu.dot_dimension_numbers<[2], [2], [1], [1], [0, 0, 0, 1, 1, 1], [0], [0]>} : vector<1x8x8xbf16>, vector<1x8x8xbf16>, vector<1x8x8xf32> -> vector<1x8x8xf32>
    "tpu.trace_stop"() : () -> ()
    %17 = arith.addf %16, %9 : vector<1x8x8xf32>
    %cst_6 = arith.constant dense<0xFF800000> : vector<1x8xf32>
    %18 = vector.multi_reduction <maximumf>, %17, %cst_6 [2] : vector<1x8x8xf32> to vector<1x8xf32>
    %19 = vector.shape_cast %18 : vector<1x8xf32> to vector<1x8x1xf32>
    %20 = vector.broadcast %19 : vector<1x8x1xf32> to vector<1x8x8xf32>
    %21 = arith.subf %17, %20 : vector<1x8x8xf32>
    %22 = math.exp %21 : vector<1x8x8xf32>
    %cst_7 = arith.constant dense<0.000000e+00> : vector<1x8xf32>
    %23 = vector.multi_reduction <add>, %22, %cst_7 [2] : vector<1x8x8xf32> to vector<1x8xf32>
    %24 = vector.shape_cast %23 : vector<1x8xf32> to vector<1x8x1xf32>
    %25 = tpu.reciprocal %24 {approx = true} : vector<1x8x1xf32> -> vector<1x8x1xf32>
    %26 = vector.broadcast %25 : vector<1x8x1xf32> to vector<1x8x8xf32>
    %27 = arith.mulf %22, %26 : vector<1x8x8xf32>
    %28 = arith.truncf %27 : vector<1x8x8xf32> to vector<1x8x8xbf16>
    "tpu.trace_start"() <{level = 10 : i32, message = "bts,bsd->btd"}> : () -> ()
    %cst_8 = arith.constant dense<0.000000e+00> : vector<1x8x8xf32>
    %29 = tpu.matmul %28, %15, %cst_8 {dimension_numbers = #tpu.dot_dimension_numbers<[2], [1], [1], [2], [0, 0, 0, 1, 1, 2], [0], [0]>} : vector<1x8x8xbf16>, vector<1x8x8xbf16>, vector<1x8x8xf32> -> vector<1x8x8xf32>
    "tpu.trace_stop"() : () -> ()
    %30 = vector.shape_cast %29 : vector<1x8x8xf32> to vector<8x8xf32>
    %31 = arith.truncf %30 : vector<8x8xf32> to vector<8x8xbf16>
    %c0_9 = arith.constant 0 : index
    %c0_10 = arith.constant 0 : index
    %32 = vector.load %arg3[%c0_9, %c0_10] : memref<32x32xbf16, #tpu.memory_space<vmem>>, vector<8x32xbf16>
    %cst_11 = arith.constant dense<0.000000e+00> : vector<8x32xf32>
    %33 = tpu.matmul %31, %32, %cst_11 {dimension_numbers = #tpu.dot_dimension_numbers<[1], [0], [0], [1], [0, 0, 1, 1], [], []>} : vector<8x8xbf16>, vector<8x32xbf16>, vector<8x32xf32> -> vector<8x32xf32>
    %c0_12 = arith.constant 0 : index
    %c0_13 = arith.constant 0 : index
    %34 = vector.load %arg6[%c0_12, %c0_13] : memref<8x32xf32, #tpu.memory_space<vmem>>, vector<8x32xf32>
    tpu.vector_store %arg6[%c0_12, %c0_13], %33 {strides = array<i32>} : memref<8x32xf32, #tpu.memory_space<vmem>>, vector<8x32xf32>,
    %35 = vector.extract_strided_slice %3 {offsets = [0, 8], sizes = [8, 8], strides = [1, 1]} : vector<8x96xbf16> to vector<8x8xbf16>
    %36 = vector.shape_cast %35 : vector<8x8xbf16> to vector<1x8x8xbf16>
    %37 = vector.extract_strided_slice %3 {offsets = [0, 40], sizes = [8, 8], strides = [1, 1]} : vector<8x96xbf16> to vector<8x8xbf16>
    %38 = vector.shape_cast %37 : vector<8x8xbf16> to vector<1x8x8xbf16>
    %39 = vector.extract_strided_slice %3 {offsets = [0, 72], sizes = [8, 8], strides = [1, 1]} : vector<8x96xbf16> to vector<8x8xbf16>
    %40 = vector.shape_cast %39 : vector<8x8xbf16> to vector<1x8x8xbf16>
    "tpu.trace_start"() <{level = 10 : i32, message = "btd,bsd->bts"}> : () -> ()
    %cst_14 = arith.constant dense<0.000000e+00> : vector<1x8x8xf32>
    %41 = tpu.matmul %36, %38, %cst_14 {dimension_numbers = #tpu.dot_dimension_numbers<[2], [2], [1], [1], [0, 0, 0, 1, 1, 1], [0], [0]>} : vector<1x8x8xbf16>, vector<1x8x8xbf16>, vector<1x8x8xf32> -> vector<1x8x8xf32>
    "tpu.trace_stop"() : () -> ()
    %42 = arith.addf %41, %9 : vector<1x8x8xf32>
    %cst_15 = arith.constant dense<0xFF800000> : vector<1x8xf32>
    %43 = vector.multi_reduction <maximumf>, %42, %cst_15 [2] : vector<1x8x8xf32> to vector<1x8xf32>
    %44 = vector.shape_cast %43 : vector<1x8xf32> to vector<1x8x1xf32>
    %45 = vector.broadcast %44 : vector<1x8x1xf32> to vector<1x8x8xf32>
    %46 = arith.subf %42, %45 : vector<1x8x8xf32>
    %47 = math.exp %46 : vector<1x8x8xf32>
    %cst_16 = arith.constant dense<0.000000e+00> : vector<1x8xf32>
    %48 = vector.multi_reduction <add>, %47, %cst_16 [2] : vector<1x8x8xf32> to vector<1x8xf32>
    %49 = vector.shape_cast %48 : vector<1x8xf32> to vector<1x8x1xf32>
    %50 = tpu.reciprocal %49 {approx = true} : vector<1x8x1xf32> -> vector<1x8x1xf32>
    %51 = vector.broadcast %50 : vector<1x8x1xf32> to vector<1x8x8xf32>
    %52 = arith.mulf %47, %51 : vector<1x8x8xf32>
    %53 = arith.truncf %52 : vector<1x8x8xf32> to vector<1x8x8xbf16>
    "tpu.trace_start"() <{level = 10 : i32, message = "bts,bsd->btd"}> : () -> ()
    %cst_17 = arith.constant dense<0.000000e+00> : vector<1x8x8xf32>
    %54 = tpu.matmul %53, %40, %cst_17 {dimension_numbers = #tpu.dot_dimension_numbers<[2], [1], [1], [2], [0, 0, 0, 1, 1, 2], [0], [0]>} : vector<1x8x8xbf16>, vector<1x8x8xbf16>, vector<1x8x8xf32> -> vector<1x8x8xf32>
    "tpu.trace_stop"() : () -> ()
    %55 = vector.shape_cast %54 : vector<1x8x8xf32> to vector<8x8xf32>
    %56 = arith.truncf %55 : vector<8x8xf32> to vector<8x8xbf16>
    %c8 = arith.constant 8 : index
    %c0_18 = arith.constant 0 : index
    %57 = vector.load %arg3[%c8, %c0_18] : memref<32x32xbf16, #tpu.memory_space<vmem>>, vector<8x32xbf16>
    %cst_19 = arith.constant dense<0.000000e+00> : vector<8x32xf32>
    %58 = tpu.matmul %56, %57, %cst_19 {dimension_numbers = #tpu.dot_dimension_numbers<[1], [0], [0], [1], [0, 0, 1, 1], [], []>} : vector<8x8xbf16>, vector<8x32xbf16>, vector<8x32xf32> -> vector<8x32xf32>
    %c0_20 = arith.constant 0 : index
    %c0_21 = arith.constant 0 : index
    %59 = vector.load %arg6[%c0_20, %c0_21] : memref<8x32xf32, #tpu.memory_space<vmem>>, vector<8x32xf32>
    %60 = arith.addf %59, %58 : vector<8x32xf32>
    %c0_22 = arith.constant 0 : index
    %c0_23 = arith.constant 0 : index
    %61 = vector.load %arg6[%c0_22, %c0_23] : memref<8x32xf32, #tpu.memory_space<vmem>>, vector<8x32xf32>
    tpu.vector_store %arg6[%c0_22, %c0_23], %60 {strides = array<i32>} : memref<8x32xf32, #tpu.memory_space<vmem>>, vector<8x32xf32>,
    %62 = vector.extract_strided_slice %3 {offsets = [0, 16], sizes = [8, 8], strides = [1, 1]} : vector<8x96xbf16> to vector<8x8xbf16>
    %63 = vector.shape_cast %62 : vector<8x8xbf16> to vector<1x8x8xbf16>
    %64 = vector.extract_strided_slice %3 {offsets = [0, 48], sizes = [8, 8], strides = [1, 1]} : vector<8x96xbf16> to vector<8x8xbf16>
    %65 = vector.shape_cast %64 : vector<8x8xbf16> to vector<1x8x8xbf16>
    %66 = vector.extract_strided_slice %3 {offsets = [0, 80], sizes = [8, 8], strides = [1, 1]} : vector<8x96xbf16> to vector<8x8xbf16>
    %67 = vector.shape_cast %66 : vector<8x8xbf16> to vector<1x8x8xbf16>
    "tpu.trace_start"() <{level = 10 : i32, message = "btd,bsd->bts"}> : () -> ()
    %cst_24 = arith.constant dense<0.000000e+00> : vector<1x8x8xf32>
    %68 = tpu.matmul %63, %65, %cst_24 {dimension_numbers = #tpu.dot_dimension_numbers<[2], [2], [1], [1], [0, 0, 0, 1, 1, 1], [0], [0]>} : vector<1x8x8xbf16>, vector<1x8x8xbf16>, vector<1x8x8xf32> -> vector<1x8x8xf32>
    "tpu.trace_stop"() : () -> ()
    %69 = arith.addf %68, %9 : vector<1x8x8xf32>
    %cst_25 = arith.constant dense<0xFF800000> : vector<1x8xf32>
    %70 = vector.multi_reduction <maximumf>, %69, %cst_25 [2] : vector<1x8x8xf32> to vector<1x8xf32>
    %71 = vector.shape_cast %70 : vector<1x8xf32> to vector<1x8x1xf32>
    %72 = vector.broadcast %71 : vector<1x8x1xf32> to vector<1x8x8xf32>
    %73 = arith.subf %69, %72 : vector<1x8x8xf32>
    %74 = math.exp %73 : vector<1x8x8xf32>
    %cst_26 = arith.constant dense<0.000000e+00> : vector<1x8xf32>
    %75 = vector.multi_reduction <add>, %74, %cst_26 [2] : vector<1x8x8xf32> to vector<1x8xf32>
    %76 = vector.shape_cast %75 : vector<1x8xf32> to vector<1x8x1xf32>
    %77 = tpu.reciprocal %76 {approx = true} : vector<1x8x1xf32> -> vector<1x8x1xf32>
    %78 = vector.broadcast %77 : vector<1x8x1xf32> to vector<1x8x8xf32>
    %79 = arith.mulf %74, %78 : vector<1x8x8xf32>
    %80 = arith.truncf %79 : vector<1x8x8xf32> to vector<1x8x8xbf16>
    "tpu.trace_start"() <{level = 10 : i32, message = "bts,bsd->btd"}> : () -> ()
    %cst_27 = arith.constant dense<0.000000e+00> : vector<1x8x8xf32>
    %81 = tpu.matmul %80, %67, %cst_27 {dimension_numbers = #tpu.dot_dimension_numbers<[2], [1], [1], [2], [0, 0, 0, 1, 1, 2], [0], [0]>} : vector<1x8x8xbf16>, vector<1x8x8xbf16>, vector<1x8x8xf32> -> vector<1x8x8xf32>
    "tpu.trace_stop"() : () -> ()
    %82 = vector.shape_cast %81 : vector<1x8x8xf32> to vector<8x8xf32>
    %83 = arith.truncf %82 : vector<8x8xf32> to vector<8x8xbf16>
    %c16 = arith.constant 16 : index
    %c0_28 = arith.constant 0 : index
    %84 = vector.load %arg3[%c16, %c0_28] : memref<32x32xbf16, #tpu.memory_space<vmem>>, vector<8x32xbf16>
    %cst_29 = arith.constant dense<0.000000e+00> : vector<8x32xf32>
    %85 = tpu.matmul %83, %84, %cst_29 {dimension_numbers = #tpu.dot_dimension_numbers<[1], [0], [0], [1], [0, 0, 1, 1], [], []>} : vector<8x8xbf16>, vector<8x32xbf16>, vector<8x32xf32> -> vector<8x32xf32>
    %c0_30 = arith.constant 0 : index
    %c0_31 = arith.constant 0 : index
    %86 = vector.load %arg6[%c0_30, %c0_31] : memref<8x32xf32, #tpu.memory_space<vmem>>, vector<8x32xf32>
    %87 = arith.addf %86, %85 : vector<8x32xf32>
    %c0_32 = arith.constant 0 : index
    %c0_33 = arith.constant 0 : index
    %88 = vector.load %arg6[%c0_32, %c0_33] : memref<8x32xf32, #tpu.memory_space<vmem>>, vector<8x32xf32>
    tpu.vector_store %arg6[%c0_32, %c0_33], %87 {strides = array<i32>} : memref<8x32xf32, #tpu.memory_space<vmem>>, vector<8x32xf32>,
    %89 = vector.extract_strided_slice %3 {offsets = [0, 24], sizes = [8, 8], strides = [1, 1]} : vector<8x96xbf16> to vector<8x8xbf16>
    %90 = vector.shape_cast %89 : vector<8x8xbf16> to vector<1x8x8xbf16>
    %91 = vector.extract_strided_slice %3 {offsets = [0, 56], sizes = [8, 8], strides = [1, 1]} : vector<8x96xbf16> to vector<8x8xbf16>
    %92 = vector.shape_cast %91 : vector<8x8xbf16> to vector<1x8x8xbf16>
    %93 = vector.extract_strided_slice %3 {offsets = [0, 88], sizes = [8, 8], strides = [1, 1]} : vector<8x96xbf16> to vector<8x8xbf16>
    %94 = vector.shape_cast %93 : vector<8x8xbf16> to vector<1x8x8xbf16>
    "tpu.trace_start"() <{level = 10 : i32, message = "btd,bsd->bts"}> : () -> ()
    %cst_34 = arith.constant dense<0.000000e+00> : vector<1x8x8xf32>
    %95 = tpu.matmul %90, %92, %cst_34 {dimension_numbers = #tpu.dot_dimension_numbers<[2], [2], [1], [1], [0, 0, 0, 1, 1, 1], [0], [0]>} : vector<1x8x8xbf16>, vector<1x8x8xbf16>, vector<1x8x8xf32> -> vector<1x8x8xf32>
    "tpu.trace_stop"() : () -> ()
    %96 = arith.addf %95, %9 : vector<1x8x8xf32>
    %cst_35 = arith.constant dense<0xFF800000> : vector<1x8xf32>
    %97 = vector.multi_reduction <maximumf>, %96, %cst_35 [2] : vector<1x8x8xf32> to vector<1x8xf32>
    %98 = vector.shape_cast %97 : vector<1x8xf32> to vector<1x8x1xf32>
    %99 = vector.broadcast %98 : vector<1x8x1xf32> to vector<1x8x8xf32>
    %100 = arith.subf %96, %99 : vector<1x8x8xf32>
    %101 = math.exp %100 : vector<1x8x8xf32>
    %cst_36 = arith.constant dense<0.000000e+00> : vector<1x8xf32>
    %102 = vector.multi_reduction <add>, %101, %cst_36 [2] : vector<1x8x8xf32> to vector<1x8xf32>
    %103 = vector.shape_cast %102 : vector<1x8xf32> to vector<1x8x1xf32>
    %104 = tpu.reciprocal %103 {approx = true} : vector<1x8x1xf32> -> vector<1x8x1xf32>
    %105 = vector.broadcast %104 : vector<1x8x1xf32> to vector<1x8x8xf32>
    %106 = arith.mulf %101, %105 : vector<1x8x8xf32>
    %107 = arith.truncf %106 : vector<1x8x8xf32> to vector<1x8x8xbf16>
    "tpu.trace_start"() <{level = 10 : i32, message = "bts,bsd->btd"}> : () -> ()
    %cst_37 = arith.constant dense<0.000000e+00> : vector<1x8x8xf32>
    %108 = tpu.matmul %107, %94, %cst_37 {dimension_numbers = #tpu.dot_dimension_numbers<[2], [1], [1], [2], [0, 0, 0, 1, 1, 2], [0], [0]>} : vector<1x8x8xbf16>, vector<1x8x8xbf16>, vector<1x8x8xf32> -> vector<1x8x8xf32>
    "tpu.trace_stop"() : () -> ()
    %109 = vector.shape_cast %108 : vector<1x8x8xf32> to vector<8x8xf32>
    %110 = arith.truncf %109 : vector<8x8xf32> to vector<8x8xbf16>
    %c24 = arith.constant 24 : index
    %c0_38 = arith.constant 0 : index
    %111 = vector.load %arg3[%c24, %c0_38] : memref<32x32xbf16, #tpu.memory_space<vmem>>, vector<8x32xbf16>
    %cst_39 = arith.constant dense<0.000000e+00> : vector<8x32xf32>
    %112 = tpu.matmul %110, %111, %cst_39 {dimension_numbers = #tpu.dot_dimension_numbers<[1], [0], [0], [1], [0, 0, 1, 1], [], []>} : vector<8x8xbf16>, vector<8x32xbf16>, vector<8x32xf32> -> vector<8x32xf32>
    %c0_40 = arith.constant 0 : index
    %c0_41 = arith.constant 0 : index
    %113 = vector.load %arg6[%c0_40, %c0_41] : memref<8x32xf32, #tpu.memory_space<vmem>>, vector<8x32xf32>
    %114 = arith.addf %113, %112 : vector<8x32xf32>
    %c0_42 = arith.constant 0 : index
    %c0_43 = arith.constant 0 : index
    %115 = vector.load %arg6[%c0_42, %c0_43] : memref<8x32xf32, #tpu.memory_space<vmem>>, vector<8x32xf32>
    tpu.vector_store %arg6[%c0_42, %c0_43], %114 {strides = array<i32>} : memref<8x32xf32, #tpu.memory_space<vmem>>, vector<8x32xf32>,
    %c0_44 = arith.constant 0 : index
    %c0_45 = arith.constant 0 : index
    %116 = vector.load %arg6[%c0_44, %c0_45] : memref<8x32xf32, #tpu.memory_space<vmem>>, vector<8x32xf32>
    %c0_46 = arith.constant 0 : index
    %c0_47 = arith.constant 0 : index
    %117 = vector.load %arg4[%c0_46, %c0_47] : memref<1x32xf32, #tpu.memory_space<vmem>>, vector<1x32xf32>
    %118 = vector.broadcast %117 : vector<1x32xf32> to vector<8x32xf32>
    %119 = arith.addf %116, %118 : vector<8x32xf32>
    %c0_48 = arith.constant 0 : index
    %c0_49 = arith.constant 0 : index
    %120 = vector.load %arg5[%c0_48, %c0_49] : memref<8x32xf32, #tpu.memory_space<vmem>>, vector<8x32xf32>
    tpu.vector_store %arg5[%c0_48, %c0_49], %119 {strides = array<i32>} : memref<8x32xf32, #tpu.memory_space<vmem>>, vector<8x32xf32>,
    return
  }
  func.func @transform_0(%arg0: i32) -> (i32, i32) {
    %c0_i32 = arith.constant 0 : i32
    %c0_i32_0 = arith.constant 0 : i32
    return %arg0, %c0_i32 : i32, i32
  }
  func.func @transform_1(%arg0: i32) -> (i32, i32) {
    %c0_i32 = arith.constant 0 : i32
    %c0_i32_0 = arith.constant 0 : i32
    %c0_i32_1 = arith.constant 0 : i32
    return %c0_i32, %c0_i32_0 : i32, i32
  }
  func.func @transform_2(%arg0: i32) -> (i32, i32) {
    %c0_i32 = arith.constant 0 : i32
    %c0_i32_0 = arith.constant 0 : i32
    %c0_i32_1 = arith.constant 0 : i32
    return %c0_i32, %c0_i32_0 : i32, i32
  }
  func.func @transform_3(%arg0: i32) -> (i32, i32) {
    %c0_i32 = arith.constant 0 : i32
    %c0_i32_0 = arith.constant 0 : i32
    %c0_i32_1 = arith.constant 0 : i32
    return %c0_i32, %c0_i32_0 : i32, i32
  }
  func.func @transform_4(%arg0: i32) -> (i32, i32) {
    %c0_i32 = arith.constant 0 : i32
    %c0_i32_0 = arith.constant 0 : i32
    return %arg0, %c0_i32 : i32, i32
  }
}

</mosaic_0001>

<llo_original>
// kernel: tpu_custom_call.1
$region0: #{tpu_custom_call.1}
  #allocation0 [shape = 'u32[]', space=smem, size = 0x4, offset = 0x4, fixed_abs, tag = 'smem constant byte address 0x4 - core index']
  #allocation1 [shape = 'u32[144,128]{1,0:T(1,128)}', space=vmem, size = 0x12000, scoped, tag = 'internal scratch']
  #allocation2 [shape = 'f32[8,32]{1,0:T(8,128)}', space=vmem, size = 0x1000, scoped, tag = 'scratch operand']
  %s0 = inlined_call_operand.hbm [shape: bf16[16,32], index: 0, kind: input, shape index: {}]
  %s1 = inlined_call_operand.hbm [shape: bf16[32,96], index: 1, kind: input, shape index: {}]
  %s2 = inlined_call_operand.hbm [shape: bf16[32,32], index: 2, kind: input, shape index: {}]
  %s3 = inlined_call_operand.vmem [shape: f32[1,32], index: 3, kind: input, shape index: {}]
  %s4 = inlined_call_operand.hbm [shape: f32[16,32], index: 4, kind: output, shape index: {}]
  %s5 = sld [smem:[#allocation0]]
  $region61: #{tpu_custom_call.1} parent=0
    _
  %s7 = ssub.s32 1, %s5
  %s8 = scalar_select 0, %s7, %s5
  $region1: #{tpu_custom_call.1} parent=0
    #allocation3 [shape = 'u8[4096]{0}', space=vmem, size = 0x1000, scoped, tag = 'input window, operand 0']
    #allocation4 [shape = 's32[2]{0}', space=sflag, size = 0x8, scoped, tag = 'scoped memory for tpu_custom_call.1']
    #allocation5 [shape = 's32[2]{0}', space=sflag, size = 0x8, scoped, tag = 'scoped memory for tpu_custom_call.1']
    #allocation6 [shape = 'u8[8192]{0}', space=vmem, size = 0x2000, scoped, tag = 'input window, operand 1, single buffered']
    #allocation7 [shape = 's32[1]{0}', space=sflag, size = 0x4, scoped, tag = 'scoped memory for tpu_custom_call.1']
    #allocation8 [shape = 'u8[8192]{0}', space=vmem, size = 0x2000, scoped, tag = 'input window, operand 2, single buffered']
    #allocation9 [shape = 'u8[8192]{0}', space=vmem, size = 0x2000, scoped, tag = 'output window, operand 0']
    %9 = vsyncpa [#allocation4], 0
    %s10 = scalar_lea.sflag [#allocation4], 1
    %11 = vsyncpa %s10, 0
    %12 = vsyncpa [#allocation7], 0
    %13 = vsyncpa [#allocation5], 0
    %s14 = scalar_lea.sflag [#allocation5], 1
    %15 = vsyncpa %s14, 0
    loop: start=0, step=1, limit=4
    $region2: #{tpu_custom_call.1} parent=1 // loop_pre_header
      _
    $region3: #{tpu_custom_call.1} parent=1 // loop_header
      %s17 = sphi 0, %s21
      %p18 = scmp.ge.s32.totalorder %s17, 4
      %s27 = sphi 0, %s29
      %s30 = sphi 0, %s27
      %s31 = sphi 0, %s30
      %s47 = sphi 0, %s31
      %s51 = sphi 0, %s51
      %s53 = sphi 0, %s51
      %s54 = sphi 0, %s53
      %s68 = sphi 0, %s54
      %s72 = sphi 0, %s72
      %s74 = sphi 0, %s72
      %s75 = sphi 0, %s74
      %s89 = sphi 0, %s75
      %s93 = sphi 0, %s93
      %s95 = sphi 0, %s93
      %s96 = sphi 0, %s95
      %s110 = sphi 0, %s96
      %s116 = sphi 0, %s118
      %s119 = sphi 0, %s116
      %s120 = sphi 0, %s119
      %s136 = sphi 0, %s120
    $region4: #{tpu_custom_call.1} parent=1 // loop_header_branch
      %20 = sbr.rel (%p18) target = $region8
    $region5: #{tpu_custom_call.1} parent=1 // loop_body
      %s22 = ssub.s32 %s17, 1
      %s23 = ssub.s32 %s17, 2
      %s24 = sadd.s32 %s17, 1
      %s25 = ssub.s32 %s17, %s24
      %p26 = scmp.eq.s32.totalorder %s25, 0
      %s28 = sadd.s32 %s27, 1
      %s29 = scalar_select %p26, %s27, %s28
      %p32 = pneg %p26
      %p33 = scmp.eq.s32.totalorder %s17, 1
      %p34 = por %p32, %p33
      %p35 = scmp.ne.s32.totalorder %s27, %s30
      %p36 = scmp.eq.s32.totalorder %s17, 0
      %p37 = por %p35, %p36
      %p38 = scmp.ne.s32.totalorder %s27, %s30
      %p39 = scmp.eq.s32.totalorder %s22, 1
      %p40 = por %p38, %p39
      %p41 = scmp.ne.s32.totalorder %s30, %s31
      %p42 = scmp.eq.s32.totalorder %s22, 0
      %p43 = por %p41, %p42
      %p44 = scmp.ne.s32.totalorder %s30, %s31
      %p45 = scmp.eq.s32.totalorder %s23, 1
      %p46 = por %p44, %p45
      %p48 = scmp.ne.s32.totalorder %s31, %s47
      %p49 = scmp.eq.s32.totalorder %s23, 0
      %p50 = por %p48, %p49
      %s52 = sadd.s32 %s51, 1
      %p55 = scmp.eq.s32.totalorder %s17, 1
      %p56 = scmp.ne.s32.totalorder %s51, %s53
      %p57 = scmp.eq.s32.totalorder %s17, 0
      %p58 = por %p56, %p57
      %p59 = scmp.ne.s32.totalorder %s51, %s53
      %p60 = scmp.eq.s32.totalorder %s22, 1
      %p61 = por %p59, %p60
      %p62 = scmp.ne.s32.totalorder %s53, %s54
      %p63 = scmp.eq.s32.totalorder %s22, 0
      %p64 = por %p62, %p63
      %p65 = scmp.ne.s32.totalorder %s53, %s54
      %p66 = scmp.eq.s32.totalorder %s23, 1
      %p67 = por %p65, %p66
      %p69 = scmp.ne.s32.totalorder %s54, %s68
      %p70 = scmp.eq.s32.totalorder %s23, 0
      %p71 = por %p69, %p70
      %s73 = sadd.s32 %s72, 1
      %p76 = scmp.eq.s32.totalorder %s17, 1
      %p77 = scmp.ne.s32.totalorder %s72, %s74
      %p78 = scmp.eq.s32.totalorder %s17, 0
      %p79 = por %p77, %p78
      %p80 = scmp.ne.s32.totalorder %s72, %s74
      %p81 = scmp.eq.s32.totalorder %s22, 1
      %p82 = por %p80, %p81
      %p83 = scmp.ne.s32.totalorder %s74, %s75
      %p84 = scmp.eq.s32.totalorder %s22, 0
      %p85 = por %p83, %p84
      %p86 = scmp.ne.s32.totalorder %s74, %s75
      %p87 = scmp.eq.s32.totalorder %s23, 1
      %p88 = por %p86, %p87
      %p90 = scmp.ne.s32.totalorder %s75, %s89
      %p91 = scmp.eq.s32.totalorder %s23, 0
      %p92 = por %p90, %p91
      %s94 = sadd.s32 %s93, 1
      %p97 = scmp.eq.s32.totalorder %s17, 1
      %p98 = scmp.ne.s32.totalorder %s93, %s95
      %p99 = scmp.eq.s32.totalorder %s17, 0
      %p100 = por %p98, %p99
      %p101 = scmp.ne.s32.totalorder %s93, %s95
      %p102 = scmp.eq.s32.totalorder %s22, 1
      %p103 = por %p101, %p102
      %p104 = scmp.ne.s32.totalorder %s95, %s96
      %p105 = scmp.eq.s32.totalorder %s22, 0
      %p106 = por %p104, %p105
      %p107 = scmp.ne.s32.totalorder %s95, %s96
      %p108 = scmp.eq.s32.totalorder %s23, 1
      %p109 = por %p107, %p108
      %p111 = scmp.ne.s32.totalorder %s96, %s110
      %p112 = scmp.eq.s32.totalorder %s23, 0
      %p113 = por %p111, %p112
      %s114 = ssub.s32 %s17, %s24
      %p115 = scmp.eq.s32.totalorder %s114, 0
      %s117 = sadd.s32 %s116, 1
      %s118 = scalar_select %p115, %s116, %s117
      %p121 = pneg %p115
      %p122 = scmp.eq.s32.totalorder %s17, 1
      %p123 = por %p121, %p122
      %p124 = scmp.ne.s32.totalorder %s116, %s119
      %p125 = scmp.eq.s32.totalorder %s17, 0
      %p126 = por %p124, %p125
      %p127 = scmp.ne.s32.totalorder %s116, %s119
      %p128 = scmp.eq.s32.totalorder %s22, 1
      %p129 = por %p127, %p128
      %p130 = scmp.ne.s32.totalorder %s119, %s120
      %p131 = scmp.eq.s32.totalorder %s22, 0
      %p132 = por %p130, %p131
      %p133 = scmp.ne.s32.totalorder %s119, %s120
      %p134 = scmp.eq.s32.totalorder %s23, 1
      %p135 = por %p133, %p134
      %p137 = scmp.ne.s32.totalorder %s120, %s136
      %p138 = scmp.eq.s32.totalorder %s23, 0
      %p139 = por %p137, %p138
      %p140 = scmp.le.s32.totalorder 1, %s17
      %p141 = scmp.lt.s32.totalorder %s17, 3
      %p142 = pnand %p140, %p141
      %p143 = pneg %p142
      // Predicated region
      $region9: #{tpu_custom_call.1} parent=5 // pred_check
        _
      $region10: #{tpu_custom_call.1} parent=5 // pred_check_branch
        %145 = sbr.rel (%p142) target = $region12
      $region11: #{tpu_custom_call.1} parent=5 // pred_region
        %s146 = ssub.s32 %s17, 1
        // Predicated region
        $region13: #{tpu_custom_call.1} parent=11 // pred_check
          %p147 = pneg %p64
        $region14: #{tpu_custom_call.1} parent=11 // pred_check_branch
          %149 = sbr.rel (%p147) target = $region16
        $region15: #{tpu_custom_call.1} parent=11 // pred_region
          %s151 = ssub.s32 256, 256
          %152 = vsyncadd [#allocation7], %s151
          %s153 = sshll.u32 [#allocation6], 4
          %s154 = int_to_ptr.vmem [resolvable:$true] %s153
          %159 = dma.hbm_to_vmem [thread:$0]  %s1, 256, %s154, [#allocation7], 64, 64, 4
        $region16: #{tpu_custom_call.1} parent=11 // pred_fallthru
          _
        // Predicated region
        $region17: #{tpu_custom_call.1} parent=11 // pred_check
          %p160 = pneg %p85
        $region18: #{tpu_custom_call.1} parent=11 // pred_check_branch
          %162 = sbr.rel (%p160) target = $region20
        $region19: #{tpu_custom_call.1} parent=11 // pred_region
          %s164 = ssub.s32 256, 256
          %165 = vsyncadd [#allocation7], %s164
          %s166 = sshll.u32 [#allocation8], 4
          %s167 = int_to_ptr.vmem [resolvable:$true] %s166
          %172 = dma.hbm_to_vmem [thread:$0]  %s2, 256, %s167, [#allocation7], 64, 64, 4
        $region20: #{tpu_custom_call.1} parent=11 // pred_fallthru
          _
        // Predicated region
        $region21: #{tpu_custom_call.1} parent=11 // pred_check
          %p173 = pneg %p106
        $region22: #{tpu_custom_call.1} parent=11 // pred_check_branch
          %175 = sbr.rel (%p173) target = $region24
        $region23: #{tpu_custom_call.1} parent=11 // pred_region
          _
        $region24: #{tpu_custom_call.1} parent=11 // pred_fallthru
          _
      $region12: #{tpu_custom_call.1} parent=5 // pred_fallthru
        _
      %p176 = scmp.lt.s32.totalorder %s17, 2
      // Predicated region
      $region25: #{tpu_custom_call.1} parent=5 // pred_check
        %p177 = pneg %p176
      $region26: #{tpu_custom_call.1} parent=5 // pred_check_branch
        %179 = sbr.rel (%p177) target = $region28
      $region27: #{tpu_custom_call.1} parent=5 // pred_region
        // Predicated region
        $region29: #{tpu_custom_call.1} parent=27 // pred_check
          %p180 = pneg %p37
        $region30: #{tpu_custom_call.1} parent=27 // pred_check_branch
          %182 = sbr.rel (%p180) target = $region32
        $region31: #{tpu_custom_call.1} parent=27 // pred_region
          %s183 = sand.u32 %s27, 1
          %s184 = scalar_lea.sflag [#allocation4], %s183
          %s185 = sand.u32 %s27, 1
          %s186 = smul.addr %s185, 4
          %s187 = scalar_lea.vmem [#allocation3], %s186
          %s189 = ssub.s32 64, 64
          %190 = vsyncadd %s184, %s189
          %s191 = smul.addr %s17, 64
          %s192 = scalar_lea.hbm %s0, %s191
          %s194 = sshll.u32 %s187, 4
          %s195 = int_to_ptr.vmem [resolvable:$true] %s194
          %197 = dma.hbm_to_vmem [thread:$0]  %s192, 64, %s195, %s184
        $region32: #{tpu_custom_call.1} parent=27 // pred_fallthru
          _
      $region28: #{tpu_custom_call.1} parent=5 // pred_fallthru
        _
      %p198 = scmp.le.s32.totalorder 1, %s17
      %p199 = scmp.lt.s32.totalorder %s17, 3
      %p200 = pnand %p198, %p199
      %p201 = pneg %p200
      // Predicated region
      $region33: #{tpu_custom_call.1} parent=5 // pred_check
        _
      $region34: #{tpu_custom_call.1} parent=5 // pred_check_branch
        %203 = sbr.rel (%p200) target = $region36
      $region35: #{tpu_custom_call.1} parent=5 // pred_region
        %s204 = ssub.s32 %s17, 1
        %s205 = sand.u32 %s30, 1
        %s206 = scalar_lea.sflag [#allocation4], %s205
        %s207 = sand.u32 %s30, 1
        %s208 = smul.addr %s207, 4
        %s209 = scalar_lea.vmem [#allocation3], %s208
        // Predicated region
        $region37: #{tpu_custom_call.1} parent=35 // pred_check
          %p210 = pneg %p43
        $region38: #{tpu_custom_call.1} parent=35 // pred_check_branch
          %212 = sbr.rel (%p210) target = $region40
        $region39: #{tpu_custom_call.1} parent=35 // pred_region
          %213 = dma.done %s206, 64
        $region40: #{tpu_custom_call.1} parent=35 // pred_fallthru
          _
        // Predicated region
        $region41: #{tpu_custom_call.1} parent=35 // pred_check
          %p214 = pneg %p64
        $region42: #{tpu_custom_call.1} parent=35 // pred_check_branch
          %216 = sbr.rel (%p214) target = $region44
        $region43: #{tpu_custom_call.1} parent=35 // pred_region
          %217 = dma.done [#allocation7], 256
        $region44: #{tpu_custom_call.1} parent=35 // pred_fallthru
          _
        // Predicated region
        $region45: #{tpu_custom_call.1} parent=35 // pred_check
          %p218 = pneg %p85
        $region46: #{tpu_custom_call.1} parent=35 // pred_check_branch
          %220 = sbr.rel (%p218) target = $region48
        $region47: #{tpu_custom_call.1} parent=35 // pred_region
          %221 = dma.done [#allocation7], 256
        $region48: #{tpu_custom_call.1} parent=35 // pred_fallthru
          _
        %s222 = sand.u32 %s30, 1
        %s223 = scalar_lea.sflag [#allocation4], %s222
        %s224 = sand.u32 %s30, 1
        %s225 = smul.addr %s224, 4
        %s226 = scalar_lea.vmem [#allocation3], %s225
        %p227 = pneg %p43
        %p228 = pneg %p40
        %p229 = pneg %p64
        %p230 = pneg %p61
        %p231 = pneg %p85
        %p232 = pneg %p82
        %p233 = pneg %p106
        %p234 = pneg %p103
        %p235 = pneg %p132
        %p236 = pneg %p129
        %s237 = sand.u32 %s119, 1
        %s238 = scalar_lea.sflag [#allocation5], %s237
        %s239 = sand.u32 %s119, 1
        %s240 = smul.addr %s239, 8
        %s241 = scalar_lea.vmem [#allocation9], %s240
        %v243 = vld [vmem:[%s209] sm:$0xf]
        %v244 = vld [vmem:[#allocation6] sm:$0xf]
        %v245 = vld [vmem:[#allocation6 + $0x4] sm:$0xf]
        %v246 = vld [vmem:[#allocation6 + $0x8] sm:$0xf]
        %v247 = vld [vmem:[#allocation6 + $0xc] sm:$0xf]
        %v252 = vunpack.c.l.b16 %v244
        %v253 = vunpack.c.l.b16 %v245
        %v254 = vunpack.c.l.b16 %v246
        %v255 = vunpack.c.l.b16 %v247
        %v256 = vpack.c.b16 %v253, %v252
        %v257 = vpack.c.b16 %v255, %v254
        %vm260 = vcmask 261120
        %v262 = vsel %vm260, %v243, 0
        %264 = vmatprep.subr.bf16.mxu0 0
        %265 = vmatpush1.bf16.msra.mxu0 0
        %266 = vmatprep.subr.bf16.mxu0 0
        %267 = vmatpush1.bf16.msra.mxu0 0
        %268 = vmatprep.subr.bf16.mxu0 0
        %269 = vmatpush1.bf16.msra.mxu0 0
        %270 = vmatprep.subr.bf16.mxu0 0
        %271 = vmatpush1.bf16.msra.mxu0 0
        %272 = vmatprep.subr.bf16.mxu0 0
        %273 = vmatpush1.bf16.msra.mxu0 0
        %274 = vmatprep.subr.bf16.mxu0 0
        %275 = vmatpush1.bf16.msra.mxu0 0
        %276 = vmatprep.subr.bf16.mxu0 0
        %277 = vmatpush1.bf16.msra.mxu0 %v257
        %278 = vmatprep.subr.bf16.mxu0 0
        %279 = vmatpush1.bf16.msra.mxu0 %v256
        %280 = vmatprep.subr.bf16.mxu0 0
        %281 = vmatpush2.bf16.msra.mxu0 0
        %282 = vmatprep.subr.bf16.mxu0 0
        %283 = vmatpush2.bf16.msra.mxu0 0
        %284 = vmatprep.subr.bf16.mxu0 0
        %285 = vmatpush2.bf16.msra.mxu0 0
        %286 = vmatprep.subr.bf16.mxu0 0
        %287 = vmatpush2.bf16.msra.mxu0 0
        %288 = vmatprep.subr.bf16.mxu0 0
        %289 = vmatpush2.bf16.msra.mxu0 0
        %290 = vmatprep.subr.bf16.mxu0 0
        %291 = vmatpush2.bf16.msra.mxu0 0
        %292 = vmatprep.subr.bf16.mxu0 0
        %293 = vmatpush2.bf16.msra.mxu0 0
        %294 = vmatprep.subr.bf16.mxu0 0
        %295 = vmatpush2.bf16.msra.mxu0 0
        %296 = vmatprep.mubr.bf16.mxu0 0
        %297 = vmatmul.mubr.bf16.gmra.mxu0 %v262
        %v298 = vpop.f32.mrf.mxu0
        %v299 = vadd.f32 0.0, %v298
        %v300 = vpop.f32.mrf.mxu0
        %v301 = vpop.f32.mrf.mxu0
        %v302 = vpop.f32.mrf.mxu0
        %303 = vdwg.mxu0
        %v304 = vpack.c.bf16 %v299, %v299
        %v305 = vlaneseq
        %v306 = vshrl.u32 %v305, 7
        %v307 = vlaneseq
        %v308 = vand.u32 %v307, 127
        %vm309 = vcmp.ge.s32.totalorder %v306, %v308
        %v310 = vsel %vm309, 0.0, -1e+30
        %312 = vrot.lane.b32.xlu0 %v304, 96
        %v313 = vpop.permute.xlu0 %312
        %vm314 = vcmask 64512
        %v316 = vsel %vm314, %v304, 0
        %v319 = vsel %vm314, %v313, 0
        %321 = vmatprep.subr.bf16.mxu0 0
        %322 = vmatpush1.bf16.xpose.msra.mxu0 0
        %323 = vmatprep.subr.bf16.mxu0 0
        %324 = vmatpush1.bf16.xpose.msra.mxu0 0
        %325 = vmatprep.subr.bf16.mxu0 0
        %326 = vmatpush1.bf16.xpose.msra.mxu0 0
        %327 = vmatprep.subr.bf16.mxu0 0
        %328 = vmatpush1.bf16.xpose.msra.mxu0 0
        %329 = vmatprep.subr.bf16.mxu0 0
        %330 = vmatpush1.bf16.xpose.msra.mxu0 0
        %331 = vmatprep.subr.bf16.mxu0 0
        %332 = vmatpush1.bf16.xpose.msra.mxu0 0
        %333 = vmatprep.subr.bf16.mxu0 0
        %334 = vmatpush1.bf16.xpose.msra.mxu0 0
        %335 = vmatprep.subr.bf16.mxu0 0
        %336 = vmatpush1.bf16.xpose.msra.mxu0 %v319
        %337 = vmatprep.subr.bf16.mxu0 0
        %338 = vmatpush2.bf16.xpose.msra.mxu0 0
        %339 = vmatprep.subr.bf16.mxu0 0
        %340 = vmatpush2.bf16.xpose.msra.mxu0 0
        %341 = vmatprep.subr.bf16.mxu0 0
        %342 = vmatpush2.bf16.xpose.msra.mxu0 0
        %343 = vmatprep.subr.bf16.mxu0 0
        %344 = vmatpush2.bf16.xpose.msra.mxu0 0
        %345 = vmatprep.subr.bf16.mxu0 0
        %346 = vmatpush2.bf16.xpose.msra.mxu0 0
        %347 = vmatprep.subr.bf16.mxu0 0
        %348 = vmatpush2.bf16.xpose.msra.mxu0 0
        %349 = vmatprep.subr.bf16.mxu0 0
        %350 = vmatpush2.bf16.xpose.msra.mxu0 0
        %351 = vmatprep.subr.bf16.mxu0 0
        %352 = vmatpush2.bf16.xpose.msra.mxu0 0
        %353 = vmatprep.mubr.bf16.mxu0 0
        %354 = vmatmul.mubr.bf16.gmra.mxu0 %v316
        %v355 = vpop.f32.mrf.mxu0
        %v356 = vadd.f32 %v310, %v355
        %v357 = vpop.f32.mrf.mxu0
        %v358 = vpop.f32.mrf.mxu0
        %v359 = vpop.f32.mrf.mxu0
        %360 = vdwg.mxu0
        %v361 = vsel %vm314, %v356, -inf
        %362 = vmax.xlane.f32.xlu0 %v361
        %v363 = vpop.xlane.xlu0 %362
        %v364 = vsub.f32 %v356, %v363
        %v365 = vmul.f32 %v364, 1.442695
        %v366 = vpow.pop %v365
        %v367 = vsel %vm314, %v366, 0.0
        %368 = vadd.xlane.f32.xlu0 %v367
        %v369 = vpop.xlane.xlu0 %368
        %v370 = vrcp.pop %v369
        %v371 = vmul.f32 %v366, %v370
        %v372 = vpack.c.bf16 %v371, %v371
        %373 = vrot.lane.b32.xlu0 %v304, 64
        %v374 = vpop.permute.xlu0 %373
        %v376 = vsel %vm314, %v372, 0
        %vm378 = vcmask 1043456
        %v380 = vsel %vm378, %v374, 0
        %382 = vmatprep.subr.bf16.mxu0 0
        %383 = vmatpush1.bf16.msra.mxu0 0
        %384 = vmatprep.subr.bf16.mxu0 0
        %385 = vmatpush1.bf16.msra.mxu0 0
        %386 = vmatprep.subr.bf16.mxu0 0
        %387 = vmatpush1.bf16.msra.mxu0 0
        %388 = vmatprep.subr.bf16.mxu0 0
        %389 = vmatpush1.bf16.msra.mxu0 0
        %390 = vmatprep.subr.bf16.mxu0 0
        %391 = vmatpush1.bf16.msra.mxu0 0
        %392 = vmatprep.subr.bf16.mxu0 0
        %393 = vmatpush1.bf16.msra.mxu0 0
        %394 = vmatprep.subr.bf16.mxu0 0
        %395 = vmatpush1.bf16.msra.mxu0 0
        %396 = vmatprep.subr.bf16.mxu0 0
        %397 = vmatpush1.bf16.msra.mxu0 %v380
        %398 = vmatprep.subr.bf16.mxu0 0
        %399 = vmatpush2.bf16.msra.mxu0 0
        %400 = vmatprep.subr.bf16.mxu0 0
        %401 = vmatpush2.bf16.msra.mxu0 0
        %402 = vmatprep.subr.bf16.mxu0 0
        %403 = vmatpush2.bf16.msra.mxu0 0
        %404 = vmatprep.subr.bf16.mxu0 0
        %405 = vmatpush2.bf16.msra.mxu0 0
        %406 = vmatprep.subr.bf16.mxu0 0
        %407 = vmatpush2.bf16.msra.mxu0 0
        %408 = vmatprep.subr.bf16.mxu0 0
        %409 = vmatpush2.bf16.msra.mxu0 0
        %410 = vmatprep.subr.bf16.mxu0 0
        %411 = vmatpush2.bf16.msra.mxu0 0
        %412 = vmatprep.subr.bf16.mxu0 0
        %413 = vmatpush2.bf16.msra.mxu0 0
        %414 = vmatprep.mubr.bf16.mxu0 0
        %415 = vmatmul.mubr.bf16.gmra.mxu0 %v376
        %v416 = vpop.f32.mrf.mxu0
        %v417 = vadd.f32 0.0, %v416
        %v418 = vpop.f32.mrf.mxu0
        %v419 = vpop.f32.mrf.mxu0
        %v420 = vpop.f32.mrf.mxu0
        %421 = vdwg.mxu0
        %v422 = vpack.c.bf16 %v417, %v417
        %v423 = vld [vmem:[#allocation8] sm:$0xf]
        %v425 = vsel %vm314, %v422, 0
        %v428 = vsel %vm378, %v423, 0
        %430 = vmatprep.subr.bf16.mxu0 0
        %431 = vmatpush1.bf16.msra.mxu0 0
        %432 = vmatprep.subr.bf16.mxu0 0
        %433 = vmatpush1.bf16.msra.mxu0 0
        %434 = vmatprep.subr.bf16.mxu0 0
        %435 = vmatpush1.bf16.msra.mxu0 0
        %436 = vmatprep.subr.bf16.mxu0 0
        %437 = vmatpush1.bf16.msra.mxu0 0
        %438 = vmatprep.subr.bf16.mxu0 0
        %439 = vmatpush1.bf16.msra.mxu0 0
        %440 = vmatprep.subr.bf16.mxu0 0
        %441 = vmatpush1.bf16.msra.mxu0 0
        %442 = vmatprep.subr.bf16.mxu0 0
        %443 = vmatpush1.bf16.msra.mxu0 0
        %444 = vmatprep.subr.bf16.mxu0 0
        %445 = vmatpush1.bf16.msra.mxu0 %v428
        %446 = vmatprep.subr.bf16.mxu0 0
        %447 = vmatpush2.bf16.msra.mxu0 0
        %448 = vmatprep.subr.bf16.mxu0 0
        %449 = vmatpush2.bf16.msra.mxu0 0
        %450 = vmatprep.subr.bf16.mxu0 0
        %451 = vmatpush2.bf16.msra.mxu0 0
        %452 = vmatprep.subr.bf16.mxu0 0
        %453 = vmatpush2.bf16.msra.mxu0 0
        %454 = vmatprep.subr.bf16.mxu0 0
        %455 = vmatpush2.bf16.msra.mxu0 0
        %456 = vmatprep.subr.bf16.mxu0 0
        %457 = vmatpush2.bf16.msra.mxu0 0
        %458 = vmatprep.subr.bf16.mxu0 0
        %459 = vmatpush2.bf16.msra.mxu0 0
        %460 = vmatprep.subr.bf16.mxu0 0
        %461 = vmatpush2.bf16.msra.mxu0 0
        %462 = vmatprep.mubr.bf16.mxu0 0
        %463 = vmatmul.mubr.bf16.gmra.mxu0 %v425
        %v464 = vpop.f32.mrf.mxu0
        %v465 = vadd.f32 0.0, %v464
        %v466 = vpop.f32.mrf.mxu0
        %v467 = vpop.f32.mrf.mxu0
        %v468 = vpop.f32.mrf.mxu0
        %469 = vdwg.mxu0
        %470 = vst.msk [vmem:[#allocation2] sm:$0xff] %vm260, %v465
        %471 = vrot.lane.b32.xlu0 %v304, 120
        %v472 = vpop.permute.xlu0 %471
        %473 = vrot.lane.b32.xlu0 %v304, 88
        %v474 = vpop.permute.xlu0 %473
        %v476 = vsel %vm314, %v472, 0
        %v479 = vsel %vm314, %v474, 0
        %481 = vmatprep.subr.bf16.mxu0 0
        %482 = vmatpush1.bf16.xpose.msra.mxu0 0
        %483 = vmatprep.subr.bf16.mxu0 0
        %484 = vmatpush1.bf16.xpose.msra.mxu0 0
        %485 = vmatprep.subr.bf16.mxu0 0
        %486 = vmatpush1.bf16.xpose.msra.mxu0 0
        %487 = vmatprep.subr.bf16.mxu0 0
        %488 = vmatpush1.bf16.xpose.msra.mxu0 0
        %489 = vmatprep.subr.bf16.mxu0 0
        %490 = vmatpush1.bf16.xpose.msra.mxu0 0
        %491 = vmatprep.subr.bf16.mxu0 0
        %492 = vmatpush1.bf16.xpose.msra.mxu0 0
        %493 = vmatprep.subr.bf16.mxu0 0
        %494 = vmatpush1.bf16.xpose.msra.mxu0 0
        %495 = vmatprep.subr.bf16.mxu0 0
        %496 = vmatpush1.bf16.xpose.msra.mxu0 %v479
        %497 = vmatprep.subr.bf16.mxu0 0
        %498 = vmatpush2.bf16.xpose.msra.mxu0 0
        %499 = vmatprep.subr.bf16.mxu0 0
        %500 = vmatpush2.bf16.xpose.msra.mxu0 0
        %501 = vmatprep.subr.bf16.mxu0 0
        %502 = vmatpush2.bf16.xpose.msra.mxu0 0
        %503 = vmatprep.subr.bf16.mxu0 0
        %504 = vmatpush2.bf16.xpose.msra.mxu0 0
        %505 = vmatprep.subr.bf16.mxu0 0
        %506 = vmatpush2.bf16.xpose.msra.mxu0 0
        %507 = vmatprep.subr.bf16.mxu0 0
        %508 = vmatpush2.bf16.xpose.msra.mxu0 0
        %509 = vmatprep.subr.bf16.mxu0 0
        %510 = vmatpush2.bf16.xpose.msra.mxu0 0
        %511 = vmatprep.subr.bf16.mxu0 0
        %512 = vmatpush2.bf16.xpose.msra.mxu0 0
        %513 = vmatprep.mubr.bf16.mxu0 0
        %514 = vmatmul.mubr.bf16.gmra.mxu0 %v476
        %v515 = vpop.f32.mrf.mxu0
        %v516 = vadd.f32 %v310, %v515
        %v517 = vpop.f32.mrf.mxu0
        %v518 = vpop.f32.mrf.mxu0
        %v519 = vpop.f32.mrf.mxu0
        %520 = vdwg.mxu0
        %v521 = vsel %vm314, %v516, -inf
        %522 = vmax.xlane.f32.xlu0 %v521
        %v523 = vpop.xlane.xlu0 %522
        %v524 = vsub.f32 %v516, %v523
        %v525 = vmul.f32 %v524, 1.442695
        %v526 = vpow.pop %v525
        %v527 = vsel %vm314, %v526, 0.0
        %528 = vadd.xlane.f32.xlu0 %v527
        %v529 = vpop.xlane.xlu0 %528
        %v530 = vrcp.pop %v529
        %v531 = vmul.f32 %v526, %v530
        %v532 = vpack.c.bf16 %v531, %v531
        %533 = vrot.lane.b32.xlu0 %v304, 56
        %v534 = vpop.permute.xlu0 %533
        %v536 = vsel %vm314, %v532, 0
        %v539 = vsel %vm378, %v534, 0
        %541 = vmatprep.subr.bf16.mxu0 0
        %542 = vmatpush1.bf16.msra.mxu0 0
        %543 = vmatprep.subr.bf16.mxu0 0
        %544 = vmatpush1.bf16.msra.mxu0 0
        %545 = vmatprep.subr.bf16.mxu0 0
        %546 = vmatpush1.bf16.msra.mxu0 0
        %547 = vmatprep.subr.bf16.mxu0 0
        %548 = vmatpush1.bf16.msra.mxu0 0
        %549 = vmatprep.subr.bf16.mxu0 0
        %550 = vmatpush1.bf16.msra.mxu0 0
        %551 = vmatprep.subr.bf16.mxu0 0
        %552 = vmatpush1.bf16.msra.mxu0 0
        %553 = vmatprep.subr.bf16.mxu0 0
        %554 = vmatpush1.bf16.msra.mxu0 0
        %555 = vmatprep.subr.bf16.mxu0 0
        %556 = vmatpush1.bf16.msra.mxu0 %v539
        %557 = vmatprep.subr.bf16.mxu0 0
        %558 = vmatpush2.bf16.msra.mxu0 0
        %559 = vmatprep.subr.bf16.mxu0 0
        %560 = vmatpush2.bf16.msra.mxu0 0
        %561 = vmatprep.subr.bf16.mxu0 0
        %562 = vmatpush2.bf16.msra.mxu0 0
        %563 = vmatprep.subr.bf16.mxu0 0
        %564 = vmatpush2.bf16.msra.mxu0 0
        %565 = vmatprep.subr.bf16.mxu0 0
        %566 = vmatpush2.bf16.msra.mxu0 0
        %567 = vmatprep.subr.bf16.mxu0 0
        %568 = vmatpush2.bf16.msra.mxu0 0
        %569 = vmatprep.subr.bf16.mxu0 0
        %570 = vmatpush2.bf16.msra.mxu0 0
        %571 = vmatprep.subr.bf16.mxu0 0
        %572 = vmatpush2.bf16.msra.mxu0 0
        %573 = vmatprep.mubr.bf16.mxu0 0
        %574 = vmatmul.mubr.bf16.gmra.mxu0 %v536
        %v575 = vpop.f32.mrf.mxu0
        %v576 = vadd.f32 0.0, %v575
        %v577 = vpop.f32.mrf.mxu0
        %v578 = vpop.f32.mrf.mxu0
        %v579 = vpop.f32.mrf.mxu0
        %580 = vdwg.mxu0
        %v581 = vpack.c.bf16 %v576, %v576
        %v582 = vld [vmem:[#allocation8 + $0x4] sm:$0xf]
        %v584 = vsel %vm314, %v581, 0
        %v587 = vsel %vm378, %v582, 0
        %589 = vmatprep.subr.bf16.mxu0 0
        %590 = vmatpush1.bf16.msra.mxu0 0
        %591 = vmatprep.subr.bf16.mxu0 0
        %592 = vmatpush1.bf16.msra.mxu0 0
        %593 = vmatprep.subr.bf16.mxu0 0
        %594 = vmatpush1.bf16.msra.mxu0 0
        %595 = vmatprep.subr.bf16.mxu0 0
        %596 = vmatpush1.bf16.msra.mxu0 0
        %597 = vmatprep.subr.bf16.mxu0 0
        %598 = vmatpush1.bf16.msra.mxu0 0
        %599 = vmatprep.subr.bf16.mxu0 0
        %600 = vmatpush1.bf16.msra.mxu0 0
        %601 = vmatprep.subr.bf16.mxu0 0
        %602 = vmatpush1.bf16.msra.mxu0 0
        %603 = vmatprep.subr.bf16.mxu0 0
        %604 = vmatpush1.bf16.msra.mxu0 %v587
        %605 = vmatprep.subr.bf16.mxu0 0
        %606 = vmatpush2.bf16.msra.mxu0 0
        %607 = vmatprep.subr.bf16.mxu0 0
        %608 = vmatpush2.bf16.msra.mxu0 0
        %609 = vmatprep.subr.bf16.mxu0 0
        %610 = vmatpush2.bf16.msra.mxu0 0
        %611 = vmatprep.subr.bf16.mxu0 0
        %612 = vmatpush2.bf16.msra.mxu0 0
        %613 = vmatprep.subr.bf16.mxu0 0
        %614 = vmatpush2.bf16.msra.mxu0 0
        %615 = vmatprep.subr.bf16.mxu0 0
        %616 = vmatpush2.bf16.msra.mxu0 0
        %617 = vmatprep.subr.bf16.mxu0 0
        %618 = vmatpush2.bf16.msra.mxu0 0
        %619 = vmatprep.subr.bf16.mxu0 0
        %620 = vmatpush2.bf16.msra.mxu0 0
        %621 = vmatprep.mubr.bf16.mxu0 0
        %622 = vmatmul.mubr.bf16.gmra.mxu0 %v584
        %v623 = vpop.f32.mrf.mxu0
        %v624 = vadd.f32 0.0, %v623
        %v625 = vpop.f32.mrf.mxu0
        %v626 = vpop.f32.mrf.mxu0
        %v627 = vpop.f32.mrf.mxu0
        %628 = vdwg.mxu0
        %v629 = vld [vmem:[#allocation2] sm:$0xff]
        %v630 = vadd.f32 %v629, %v624
        %631 = vst.msk [vmem:[#allocation2] sm:$0xff] %vm260, %v630
        %632 = vrot.lane.b32.xlu0 %v304, 112
        %v633 = vpop.permute.xlu0 %632
        %634 = vrot.lane.b32.xlu0 %v304, 80
        %v635 = vpop.permute.xlu0 %634
        %v637 = vsel %vm314, %v633, 0
        %v640 = vsel %vm314, %v635, 0
        %642 = vmatprep.subr.bf16.mxu0 0
        %643 = vmatpush1.bf16.xpose.msra.mxu0 0
        %644 = vmatprep.subr.bf16.mxu0 0
        %645 = vmatpush1.bf16.xpose.msra.mxu0 0
        %646 = vmatprep.subr.bf16.mxu0 0
        %647 = vmatpush1.bf16.xpose.msra.mxu0 0
        %648 = vmatprep.subr.bf16.mxu0 0
        %649 = vmatpush1.bf16.xpose.msra.mxu0 0
        %650 = vmatprep.subr.bf16.mxu0 0
        %651 = vmatpush1.bf16.xpose.msra.mxu0 0
        %652 = vmatprep.subr.bf16.mxu0 0
        %653 = vmatpush1.bf16.xpose.msra.mxu0 0
        %654 = vmatprep.subr.bf16.mxu0 0
        %655 = vmatpush1.bf16.xpose.msra.mxu0 0
        %656 = vmatprep.subr.bf16.mxu0 0
        %657 = vmatpush1.bf16.xpose.msra.mxu0 %v640
        %658 = vmatprep.subr.bf16.mxu0 0
        %659 = vmatpush2.bf16.xpose.msra.mxu0 0
        %660 = vmatprep.subr.bf16.mxu0 0
        %661 = vmatpush2.bf16.xpose.msra.mxu0 0
        %662 = vmatprep.subr.bf16.mxu0 0
        %663 = vmatpush2.bf16.xpose.msra.mxu0 0
        %664 = vmatprep.subr.bf16.mxu0 0
        %665 = vmatpush2.bf16.xpose.msra.mxu0 0
        %666 = vmatprep.subr.bf16.mxu0 0
        %667 = vmatpush2.bf16.xpose.msra.mxu0 0
        %668 = vmatprep.subr.bf16.mxu0 0
        %669 = vmatpush2.bf16.xpose.msra.mxu0 0
        %670 = vmatprep.subr.bf16.mxu0 0
        %671 = vmatpush2.bf16.xpose.msra.mxu0 0
        %672 = vmatprep.subr.bf16.mxu0 0
        %673 = vmatpush2.bf16.xpose.msra.mxu0 0
        %674 = vmatprep.mubr.bf16.mxu0 0
        %675 = vmatmul.mubr.bf16.gmra.mxu0 %v637
        %v676 = vpop.f32.mrf.mxu0
        %v677 = vadd.f32 %v310, %v676
        %v678 = vpop.f32.mrf.mxu0
        %v679 = vpop.f32.mrf.mxu0
        %v680 = vpop.f32.mrf.mxu0
        %681 = vdwg.mxu0
        %v682 = vsel %vm314, %v677, -inf
        %683 = vmax.xlane.f32.xlu0 %v682
        %v684 = vpop.xlane.xlu0 %683
        %v685 = vsub.f32 %v677, %v684
        %v686 = vmul.f32 %v685, 1.442695
        %v687 = vpow.pop %v686
        %v688 = vsel %vm314, %v687, 0.0
        %689 = vadd.xlane.f32.xlu0 %v688
        %v690 = vpop.xlane.xlu0 %689
        %v691 = vrcp.pop %v690
        %v692 = vmul.f32 %v687, %v691
        %v693 = vpack.c.bf16 %v692, %v692
        %694 = vrot.lane.b32.xlu0 %v304, 48
        %v695 = vpop.permute.xlu0 %694
        %v697 = vsel %vm314, %v693, 0
        %v700 = vsel %vm378, %v695, 0
        %702 = vmatprep.subr.bf16.mxu0 0
        %703 = vmatpush1.bf16.msra.mxu0 0
        %704 = vmatprep.subr.bf16.mxu0 0
        %705 = vmatpush1.bf16.msra.mxu0 0
        %706 = vmatprep.subr.bf16.mxu0 0
        %707 = vmatpush1.bf16.msra.mxu0 0
        %708 = vmatprep.subr.bf16.mxu0 0
        %709 = vmatpush1.bf16.msra.mxu0 0
        %710 = vmatprep.subr.bf16.mxu0 0
        %711 = vmatpush1.bf16.msra.mxu0 0
        %712 = vmatprep.subr.bf16.mxu0 0
        %713 = vmatpush1.bf16.msra.mxu0 0
        %714 = vmatprep.subr.bf16.mxu0 0
        %715 = vmatpush1.bf16.msra.mxu0 0
        %716 = vmatprep.subr.bf16.mxu0 0
        %717 = vmatpush1.bf16.msra.mxu0 %v700
        %718 = vmatprep.subr.bf16.mxu0 0
        %719 = vmatpush2.bf16.msra.mxu0 0
        %720 = vmatprep.subr.bf16.mxu0 0
        %721 = vmatpush2.bf16.msra.mxu0 0
        %722 = vmatprep.subr.bf16.mxu0 0
        %723 = vmatpush2.bf16.msra.mxu0 0
        %724 = vmatprep.subr.bf16.mxu0 0
        %725 = vmatpush2.bf16.msra.mxu0 0
        %726 = vmatprep.subr.bf16.mxu0 0
        %727 = vmatpush2.bf16.msra.mxu0 0
        %728 = vmatprep.subr.bf16.mxu0 0
        %729 = vmatpush2.bf16.msra.mxu0 0
        %730 = vmatprep.subr.bf16.mxu0 0
        %731 = vmatpush2.bf16.msra.mxu0 0
        %732 = vmatprep.subr.bf16.mxu0 0
        %733 = vmatpush2.bf16.msra.mxu0 0
        %734 = vmatprep.mubr.bf16.mxu0 0
        %735 = vmatmul.mubr.bf16.gmra.mxu0 %v697
        %v736 = vpop.f32.mrf.mxu0
        %v737 = vadd.f32 0.0, %v736
        %v738 = vpop.f32.mrf.mxu0
        %v739 = vpop.f32.mrf.mxu0
        %v740 = vpop.f32.mrf.mxu0
        %741 = vdwg.mxu0
        %v742 = vpack.c.bf16 %v737, %v737
        %v743 = vld [vmem:[#allocation8 + $0x8] sm:$0xf]
        %v745 = vsel %vm314, %v742, 0
        %v748 = vsel %vm378, %v743, 0
        %750 = vmatprep.subr.bf16.mxu0 0
        %751 = vmatpush1.bf16.msra.mxu0 0
        %752 = vmatprep.subr.bf16.mxu0 0
        %753 = vmatpush1.bf16.msra.mxu0 0
        %754 = vmatprep.subr.bf16.mxu0 0
        %755 = vmatpush1.bf16.msra.mxu0 0
        %756 = vmatprep.subr.bf16.mxu0 0
        %757 = vmatpush1.bf16.msra.mxu0 0
        %758 = vmatprep.subr.bf16.mxu0 0
        %759 = vmatpush1.bf16.msra.mxu0 0
        %760 = vmatprep.subr.bf16.mxu0 0
        %761 = vmatpush1.bf16.msra.mxu0 0
        %762 = vmatprep.subr.bf16.mxu0 0
        %763 = vmatpush1.bf16.msra.mxu0 0
        %764 = vmatprep.subr.bf16.mxu0 0
        %765 = vmatpush1.bf16.msra.mxu0 %v748
        %766 = vmatprep.subr.bf16.mxu0 0
        %767 = vmatpush2.bf16.msra.mxu0 0
        %768 = vmatprep.subr.bf16.mxu0 0
        %769 = vmatpush2.bf16.msra.mxu0 0
        %770 = vmatprep.subr.bf16.mxu0 0
        %771 = vmatpush2.bf16.msra.mxu0 0
        %772 = vmatprep.subr.bf16.mxu0 0
        %773 = vmatpush2.bf16.msra.mxu0 0
        %774 = vmatprep.subr.bf16.mxu0 0
        %775 = vmatpush2.bf16.msra.mxu0 0
        %776 = vmatprep.subr.bf16.mxu0 0
        %777 = vmatpush2.bf16.msra.mxu0 0
        %778 = vmatprep.subr.bf16.mxu0 0
        %779 = vmatpush2.bf16.msra.mxu0 0
        %780 = vmatprep.subr.bf16.mxu0 0
        %781 = vmatpush2.bf16.msra.mxu0 0
        %782 = vmatprep.mubr.bf16.mxu0 0
        %783 = vmatmul.mubr.bf16.gmra.mxu0 %v745
        %v784 = vpop.f32.mrf.mxu0
        %v785 = vadd.f32 0.0, %v784
        %v786 = vpop.f32.mrf.mxu0
        %v787 = vpop.f32.mrf.mxu0
        %v788 = vpop.f32.mrf.mxu0
        %789 = vdwg.mxu0
        %v790 = vld [vmem:[#allocation2] sm:$0xff]
        %v791 = vadd.f32 %v790, %v785
        %792 = vst.msk [vmem:[#allocation2] sm:$0xff] %vm260, %v791
        %793 = vrot.lane.b32.xlu0 %v304, 104
        %v794 = vpop.permute.xlu0 %793
        %795 = vrot.lane.b32.xlu0 %v304, 72
        %v796 = vpop.permute.xlu0 %795
        %v798 = vsel %vm314, %v794, 0
        %v801 = vsel %vm314, %v796, 0
        %803 = vmatprep.subr.bf16.mxu0 0
        %804 = vmatpush1.bf16.xpose.msra.mxu0 0
        %805 = vmatprep.subr.bf16.mxu0 0
        %806 = vmatpush1.bf16.xpose.msra.mxu0 0
        %807 = vmatprep.subr.bf16.mxu0 0
        %808 = vmatpush1.bf16.xpose.msra.mxu0 0
        %809 = vmatprep.subr.bf16.mxu0 0
        %810 = vmatpush1.bf16.xpose.msra.mxu0 0
        %811 = vmatprep.subr.bf16.mxu0 0
        %812 = vmatpush1.bf16.xpose.msra.mxu0 0
        %813 = vmatprep.subr.bf16.mxu0 0
        %814 = vmatpush1.bf16.xpose.msra.mxu0 0
        %815 = vmatprep.subr.bf16.mxu0 0
        %816 = vmatpush1.bf16.xpose.msra.mxu0 0
        %817 = vmatprep.subr.bf16.mxu0 0
        %818 = vmatpush1.bf16.xpose.msra.mxu0 %v801
        %819 = vmatprep.subr.bf16.mxu0 0
        %820 = vmatpush2.bf16.xpose.msra.mxu0 0
        %821 = vmatprep.subr.bf16.mxu0 0
        %822 = vmatpush2.bf16.xpose.msra.mxu0 0
        %823 = vmatprep.subr.bf16.mxu0 0
        %824 = vmatpush2.bf16.xpose.msra.mxu0 0
        %825 = vmatprep.subr.bf16.mxu0 0
        %826 = vmatpush2.bf16.xpose.msra.mxu0 0
        %827 = vmatprep.subr.bf16.mxu0 0
        %828 = vmatpush2.bf16.xpose.msra.mxu0 0
        %829 = vmatprep.subr.bf16.mxu0 0
        %830 = vmatpush2.bf16.xpose.msra.mxu0 0
        %831 = vmatprep.subr.bf16.mxu0 0
        %832 = vmatpush2.bf16.xpose.msra.mxu0 0
        %833 = vmatprep.subr.bf16.mxu0 0
        %834 = vmatpush2.bf16.xpose.msra.mxu0 0
        %835 = vmatprep.mubr.bf16.mxu0 0
        %836 = vmatmul.mubr.bf16.gmra.mxu0 %v798
        %v837 = vpop.f32.mrf.mxu0
        %v838 = vadd.f32 %v310, %v837
        %v839 = vpop.f32.mrf.mxu0
        %v840 = vpop.f32.mrf.mxu0
        %v841 = vpop.f32.mrf.mxu0
        %842 = vdwg.mxu0
        %v843 = vsel %vm314, %v838, -inf
        %844 = vmax.xlane.f32.xlu0 %v843
        %v845 = vpop.xlane.xlu0 %844
        %v846 = vsub.f32 %v838, %v845
        %v847 = vmul.f32 %v846, 1.442695
        %v848 = vpow.pop %v847
        %v849 = vsel %vm314, %v848, 0.0
        %850 = vadd.xlane.f32.xlu0 %v849
        %v851 = vpop.xlane.xlu0 %850
        %v852 = vrcp.pop %v851
        %v853 = vmul.f32 %v848, %v852
        %v854 = vpack.c.bf16 %v853, %v853
        %855 = vrot.lane.b32.xlu0 %v304, 40
        %v856 = vpop.permute.xlu0 %855
        %v858 = vsel %vm314, %v854, 0
        %v861 = vsel %vm378, %v856, 0
        %863 = vmatprep.subr.bf16.mxu0 0
        %864 = vmatpush1.bf16.msra.mxu0 0
        %865 = vmatprep.subr.bf16.mxu0 0
        %866 = vmatpush1.bf16.msra.mxu0 0
        %867 = vmatprep.subr.bf16.mxu0 0
        %868 = vmatpush1.bf16.msra.mxu0 0
        %869 = vmatprep.subr.bf16.mxu0 0
        %870 = vmatpush1.bf16.msra.mxu0 0
        %871 = vmatprep.subr.bf16.mxu0 0
        %872 = vmatpush1.bf16.msra.mxu0 0
        %873 = vmatprep.subr.bf16.mxu0 0
        %874 = vmatpush1.bf16.msra.mxu0 0
        %875 = vmatprep.subr.bf16.mxu0 0
        %876 = vmatpush1.bf16.msra.mxu0 0
        %877 = vmatprep.subr.bf16.mxu0 0
        %878 = vmatpush1.bf16.msra.mxu0 %v861
        %879 = vmatprep.subr.bf16.mxu0 0
        %880 = vmatpush2.bf16.msra.mxu0 0
        %881 = vmatprep.subr.bf16.mxu0 0
        %882 = vmatpush2.bf16.msra.mxu0 0
        %883 = vmatprep.subr.bf16.mxu0 0
        %884 = vmatpush2.bf16.msra.mxu0 0
        %885 = vmatprep.subr.bf16.mxu0 0
        %886 = vmatpush2.bf16.msra.mxu0 0
        %887 = vmatprep.subr.bf16.mxu0 0
        %888 = vmatpush2.bf16.msra.mxu0 0
        %889 = vmatprep.subr.bf16.mxu0 0
        %890 = vmatpush2.bf16.msra.mxu0 0
        %891 = vmatprep.subr.bf16.mxu0 0
        %892 = vmatpush2.bf16.msra.mxu0 0
        %893 = vmatprep.subr.bf16.mxu0 0
        %894 = vmatpush2.bf16.msra.mxu0 0
        %895 = vmatprep.mubr.bf16.mxu0 0
        %896 = vmatmul.mubr.bf16.gmra.mxu0 %v858
        %v897 = vpop.f32.mrf.mxu0
        %v898 = vadd.f32 0.0, %v897
        %v899 = vpop.f32.mrf.mxu0
        %v900 = vpop.f32.mrf.mxu0
        %v901 = vpop.f32.mrf.mxu0
        %902 = vdwg.mxu0
        %v903 = vpack.c.bf16 %v898, %v898
        %v904 = vld [vmem:[#allocation8 + $0xc] sm:$0xf]
        %v906 = vsel %vm314, %v903, 0
        %v909 = vsel %vm378, %v904, 0
        %911 = vmatprep.subr.bf16.mxu0 0
        %912 = vmatpush1.bf16.msra.mxu0 0
        %913 = vmatprep.subr.bf16.mxu0 0
        %914 = vmatpush1.bf16.msra.mxu0 0
        %915 = vmatprep.subr.bf16.mxu0 0
        %916 = vmatpush1.bf16.msra.mxu0 0
        %917 = vmatprep.subr.bf16.mxu0 0
        %918 = vmatpush1.bf16.msra.mxu0 0
        %919 = vmatprep.subr.bf16.mxu0 0
        %920 = vmatpush1.bf16.msra.mxu0 0
        %921 = vmatprep.subr.bf16.mxu0 0
        %922 = vmatpush1.bf16.msra.mxu0 0
        %923 = vmatprep.subr.bf16.mxu0 0
        %924 = vmatpush1.bf16.msra.mxu0 0
        %925 = vmatprep.subr.bf16.mxu0 0
        %926 = vmatpush1.bf16.msra.mxu0 %v909
        %927 = vmatprep.subr.bf16.mxu0 0
        %928 = vmatpush2.bf16.msra.mxu0 0
        %929 = vmatprep.subr.bf16.mxu0 0
        %930 = vmatpush2.bf16.msra.mxu0 0
        %931 = vmatprep.subr.bf16.mxu0 0
        %932 = vmatpush2.bf16.msra.mxu0 0
        %933 = vmatprep.subr.bf16.mxu0 0
        %934 = vmatpush2.bf16.msra.mxu0 0
        %935 = vmatprep.subr.bf16.mxu0 0
        %936 = vmatpush2.bf16.msra.mxu0 0
        %937 = vmatprep.subr.bf16.mxu0 0
        %938 = vmatpush2.bf16.msra.mxu0 0
        %939 = vmatprep.subr.bf16.mxu0 0
        %940 = vmatpush2.bf16.msra.mxu0 0
        %941 = vmatprep.subr.bf16.mxu0 0
        %942 = vmatpush2.bf16.msra.mxu0 0
        %943 = vmatprep.mubr.bf16.mxu0 0
        %944 = vmatmul.mubr.bf16.gmra.mxu0 %v906
        %v945 = vpop.f32.mrf.mxu0
        %v946 = vadd.f32 0.0, %v945
        %v947 = vpop.f32.mrf.mxu0
        %v948 = vpop.f32.mrf.mxu0
        %v949 = vpop.f32.mrf.mxu0
        %950 = vdwg.mxu0
        %v951 = vld [vmem:[#allocation2] sm:$0xff]
        %v952 = vadd.f32 %v951, %v946
        %953 = vst.msk [vmem:[#allocation2] sm:$0xff] %vm260, %v952
        %v954 = vld [vmem:[#allocation2] sm:$0xff]
        %v955 = vld [vmem:[%s3] sm:$0x1]
        %v957 = vlaneseq
        %v958 = vshrl.u32 %v957, 7
        %v959 = vsub.s32 0, %v958
        %v960 = vrot.slane %v955, %v959
        %v962 = vadd.f32 %v954, %v960
        %963 = vst.msk [vmem:[%s241] sm:$0xff] %vm260, %v962
        %s964 = sand.u32 %s119, 1
        %s965 = scalar_lea.sflag [#allocation5], %s964
        %s966 = sand.u32 %s119, 1
        %s967 = smul.addr %s966, 8
        %s968 = scalar_lea.vmem [#allocation9], %s967
        // Predicated region
        $region49: #{tpu_custom_call.1} parent=35 // pred_check
          %p969 = pneg %p129
        $region50: #{tpu_custom_call.1} parent=35 // pred_check_branch
          %971 = sbr.rel (%p969) target = $region52
        $region51: #{tpu_custom_call.1} parent=35 // pred_region
          %s973 = ssub.s32 128, 128
          %974 = vsyncadd %s965, %s973
          %s975 = smul.addr %s22, 128
          %s976 = scalar_lea.hbm %s4, %s975
          %s978 = sshll.u32 %s968, 4
          %s979 = int_to_ptr.vmem [resolvable:$true] %s978
          %981 = dma.vmem_to_hbm [thread:$0]  %s979, 128, %s976, %s965
        $region52: #{tpu_custom_call.1} parent=35 // pred_fallthru
          _
      $region36: #{tpu_custom_call.1} parent=5 // pred_fallthru
        _
      %p982 = scmp.le.s32.totalorder 2, %s17
      // Predicated region
      $region53: #{tpu_custom_call.1} parent=5 // pred_check
        %p983 = pneg %p982
      $region54: #{tpu_custom_call.1} parent=5 // pred_check_branch
        %985 = sbr.rel (%p983) target = $region56
      $region55: #{tpu_custom_call.1} parent=5 // pred_region
        %s986 = ssub.s32 %s17, 2
        // Predicated region
        $region57: #{tpu_custom_call.1} parent=55 // pred_check
          %p987 = pneg %p135
        $region58: #{tpu_custom_call.1} parent=55 // pred_check_branch
          %989 = sbr.rel (%p987) target = $region60
        $region59: #{tpu_custom_call.1} parent=55 // pred_region
          %s990 = sand.u32 %s120, 1
          %s991 = scalar_lea.sflag [#allocation5], %s990
          %s992 = sand.u32 %s120, 1
          %s993 = smul.addr %s992, 8
          %s994 = scalar_lea.vmem [#allocation9], %s993
          %995 = dma.done %s991, 128
        $region60: #{tpu_custom_call.1} parent=55 // pred_fallthru
          _
      $region56: #{tpu_custom_call.1} parent=5 // pred_fallthru
        _
    $region6: #{tpu_custom_call.1} parent=1 // loop_footer
      %s21 = sadd.s32 1, %s17
    $region7: #{tpu_custom_call.1} parent=1 // loop_footer_branch
      %16 = sbr.rel target = $region3
    $region8: #{tpu_custom_call.1} parent=1 // loop_exit
      _
    %996 = vsyncpa [#allocation4], 1
    %s997 = scalar_lea.sflag [#allocation4], 1
    %998 = vsyncpa %s997, 1
    %999 = vsyncpa [#allocation7], 1
    %1000 = vsyncpa [#allocation5], 1
    %s1001 = scalar_lea.sflag [#allocation5], 1
    %1002 = vsyncpa %s1001, 1

// kernel: tpu_custom_call.1
$region0: #{tpu_custom_call.1}
  #allocation0 [shape = 'u32[]', space=smem, size = 0x4, offset = 0x4, fixed_abs, tag = 'smem constant byte address 0x4 - core index']
  #allocation1 [shape = 'u32[144,128]{1,0:T(1,128)}', space=vmem, size = 0x12000, scoped, tag = 'internal scratch']
  #allocation2 [shape = 'f32[8,32]{1,0:T(8,128)}', space=vmem, size = 0x1000, scoped, tag = 'scratch operand']
  %s0 = inlined_call_operand.hbm [shape: bf16[16,32], index: 0, kind: input, shape index: {}]
  %s1 = inlined_call_operand.hbm [shape: bf16[32,96], index: 1, kind: input, shape index: {}]
  %s2 = inlined_call_operand.hbm [shape: bf16[32,32], index: 2, kind: input, shape index: {}]
  %s3 = inlined_call_operand.vmem [shape: f32[1,32], index: 3, kind: input, shape index: {}]
  %s4 = inlined_call_operand.hbm [shape: f32[16,32], index: 4, kind: output, shape index: {}]
  %s5 = sld [smem:[#allocation0]]
  $region61: #{tpu_custom_call.1} parent=0
    _
  %s7 = ssub.s32 1, %s5
  %s8 = scalar_select 0, %s7, %s5
  $region1: #{tpu_custom_call.1} parent=0
    #allocation3 [shape = 'u8[4096]{0}', space=vmem, size = 0x1000, scoped, tag = 'input window, operand 0']
    #allocation4 [shape = 's32[2]{0}', space=sflag, size = 0x8, scoped, tag = 'scoped memory for tpu_custom_call.1']
    #allocation5 [shape = 's32[2]{0}', space=sflag, size = 0x8, scoped, tag = 'scoped memory for tpu_custom_call.1']
    #allocation6 [shape = 'u8[8192]{0}', space=vmem, size = 0x2000, scoped, tag = 'input window, operand 1, single buffered']
    #allocation7 [shape = 's32[1]{0}', space=sflag, size = 0x4, scoped, tag = 'scoped memory for tpu_custom_call.1']
    #allocation8 [shape = 'u8[8192]{0}', space=vmem, size = 0x2000, scoped, tag = 'input window, operand 2, single buffered']
    #allocation9 [shape = 'u8[8192]{0}', space=vmem, size = 0x2000, scoped, tag = 'output window, operand 0']
    %9 = vsyncpa [#allocation4], 0
    %s10 = scalar_lea.sflag [#allocation4], 1
    %11 = vsyncpa %s10, 0
    %12 = vsyncpa [#allocation7], 0
    %13 = vsyncpa [#allocation5], 0
    %s14 = scalar_lea.sflag [#allocation5], 1
    %15 = vsyncpa %s14, 0
    loop: start=0, step=1, limit=4
    $region2: #{tpu_custom_call.1} parent=1 // loop_pre_header
      _
    $region3: #{tpu_custom_call.1} parent=1 // loop_header
      %s17 = sphi 0, %s21
      %p18 = scmp.ge.s32.totalorder %s17, 4
      %s27 = sphi 0, %s29
      %s30 = sphi 0, %s27
      %s31 = sphi 0, %s30
      %s47 = sphi 0, %s31
      %s51 = sphi 0, %s51
      %s53 = sphi 0, %s51
      %s54 = sphi 0, %s53
      %s68 = sphi 0, %s54
      %s72 = sphi 0, %s72
      %s74 = sphi 0, %s72
      %s75 = sphi 0, %s74
      %s89 = sphi 0, %s75
      %s93 = sphi 0, %s93
      %s95 = sphi 0, %s93
      %s96 = sphi 0, %s95
      %s110 = sphi 0, %s96
      %s116 = sphi 0, %s118
      %s119 = sphi 0, %s116
      %s120 = sphi 0, %s119
      %s136 = sphi 0, %s120
    $region4: #{tpu_custom_call.1} parent=1 // loop_header_branch
      %20 = sbr.rel (%p18) target = $region8
    $region5: #{tpu_custom_call.1} parent=1 // loop_body
      %s22 = ssub.s32 %s17, 1
      %s23 = ssub.s32 %s17, 2
      %s24 = sadd.s32 %s17, 1
      %s25 = ssub.s32 %s17, %s24
      %p26 = scmp.eq.s32.totalorder %s25, 0
      %s28 = sadd.s32 %s27, 1
      %s29 = scalar_select %p26, %s27, %s28
      %p32 = pneg %p26
      %p33 = scmp.eq.s32.totalorder %s17, 1
      %p34 = por %p32, %p33
      %p35 = scmp.ne.s32.totalorder %s27, %s30
      %p36 = scmp.eq.s32.totalorder %s17, 0
      %p37 = por %p35, %p36
      %p38 = scmp.ne.s32.totalorder %s27, %s30
      %p39 = scmp.eq.s32.totalorder %s22, 1
      %p40 = por %p38, %p39
      %p41 = scmp.ne.s32.totalorder %s30, %s31
      %p42 = scmp.eq.s32.totalorder %s22, 0
      %p43 = por %p41, %p42
      %p44 = scmp.ne.s32.totalorder %s30, %s31
      %p45 = scmp.eq.s32.totalorder %s23, 1
      %p46 = por %p44, %p45
      %p48 = scmp.ne.s32.totalorder %s31, %s47
      %p49 = scmp.eq.s32.totalorder %s23, 0
      %p50 = por %p48, %p49
      %s52 = sadd.s32 %s51, 1
      %p55 = scmp.eq.s32.totalorder %s17, 1
      %p56 = scmp.ne.s32.totalorder %s51, %s53
      %p57 = scmp.eq.s32.totalorder %s17, 0
      %p58 = por %p56, %p57
      %p59 = scmp.ne.s32.totalorder %s51, %s53
      %p60 = scmp.eq.s32.totalorder %s22, 1
      %p61 = por %p59, %p60
      %p62 = scmp.ne.s32.totalorder %s53, %s54
      %p63 = scmp.eq.s32.totalorder %s22, 0
      %p64 = por %p62, %p63
      %p65 = scmp.ne.s32.totalorder %s53, %s54
      %p66 = scmp.eq.s32.totalorder %s23, 1
      %p67 = por %p65, %p66
      %p69 = scmp.ne.s32.totalorder %s54, %s68
      %p70 = scmp.eq.s32.totalorder %s23, 0
      %p71 = por %p69, %p70
      %s73 = sadd.s32 %s72, 1
      %p76 = scmp.eq.s32.totalorder %s17, 1
      %p77 = scmp.ne.s32.totalorder %s72, %s74
      %p78 = scmp.eq.s32.totalorder %s17, 0
      %p79 = por %p77, %p78
      %p80 = scmp.ne.s32.totalorder %s72, %s74
      %p81 = scmp.eq.s32.totalorder %s22, 1
      %p82 = por %p80, %p81
      %p83 = scmp.ne.s32.totalorder %s74, %s75
      %p84 = scmp.eq.s32.totalorder %s22, 0
      %p85 = por %p83, %p84
      %p86 = scmp.ne.s32.totalorder %s74, %s75
      %p87 = scmp.eq.s32.totalorder %s23, 1
      %p88 = por %p86, %p87
      %p90 = scmp.ne.s32.totalorder %s75, %s89
      %p91 = scmp.eq.s32.totalorder %s23, 0
      %p92 = por %p90, %p91
      %s94 = sadd.s32 %s93, 1
      %p97 = scmp.eq.s32.totalorder %s17, 1
      %p98 = scmp.ne.s32.totalorder %s93, %s95
      %p99 = scmp.eq.s32.totalorder %s17, 0
      %p100 = por %p98, %p99
      %p101 = scmp.ne.s32.totalorder %s93, %s95
      %p102 = scmp.eq.s32.totalorder %s22, 1
      %p103 = por %p101, %p102
      %p104 = scmp.ne.s32.totalorder %s95, %s96
      %p105 = scmp.eq.s32.totalorder %s22, 0
      %p106 = por %p104, %p105
      %p107 = scmp.ne.s32.totalorder %s95, %s96
      %p108 = scmp.eq.s32.totalorder %s23, 1
      %p109 = por %p107, %p108
      %p111 = scmp.ne.s32.totalorder %s96, %s110
      %p112 = scmp.eq.s32.totalorder %s23, 0
      %p113 = por %p111, %p112
      %s114 = ssub.s32 %s17, %s24
      %p115 = scmp.eq.s32.totalorder %s114, 0
      %s117 = sadd.s32 %s116, 1
      %s118 = scalar_select %p115, %s116, %s117
      %p121 = pneg %p115
      %p122 = scmp.eq.s32.totalorder %s17, 1
      %p123 = por %p121, %p122
      %p124 = scmp.ne.s32.totalorder %s116, %s119
      %p125 = scmp.eq.s32.totalorder %s17, 0
      %p126 = por %p124, %p125
      %p127 = scmp.ne.s32.totalorder %s116, %s119
      %p128 = scmp.eq.s32.totalorder %s22, 1
      %p129 = por %p127, %p128
      %p130 = scmp.ne.s32.totalorder %s119, %s120
      %p131 = scmp.eq.s32.totalorder %s22, 0
      %p132 = por %p130, %p131
      %p133 = scmp.ne.s32.totalorder %s119, %s120
      %p134 = scmp.eq.s32.totalorder %s23, 1
      %p135 = por %p133, %p134
      %p137 = scmp.ne.s32.totalorder %s120, %s136
      %p138 = scmp.eq.s32.totalorder %s23, 0
      %p139 = por %p137, %p138
      %p140 = scmp.le.s32.totalorder 1, %s17
      %p141 = scmp.lt.s32.totalorder %s17, 3
      %p142 = pnand %p140, %p141
      %p143 = pneg %p142
      // Predicated region
      $region9: #{tpu_custom_call.1} parent=5 // pred_check
        _
      $region10: #{tpu_custom_call.1} parent=5 // pred_check_branch
        %145 = sbr.rel (%p142) target = $region12
      $region11: #{tpu_custom_call.1} parent=5 // pred_region
        %s146 = ssub.s32 %s17, 1
        // Predicated region
        $region13: #{tpu_custom_call.1} parent=11 // pred_check
          %p147 = pneg %p64
        $region14: #{tpu_custom_call.1} parent=11 // pred_check_branch
          %149 = sbr.rel (%p147) target = $region16
        $region15: #{tpu_custom_call.1} parent=11 // pred_region
          %s151 = ssub.s32 256, 256
          %152 = vsyncadd [#allocation7], %s151
          %s153 = sshll.u32 [#allocation6], 4
          %s154 = int_to_ptr.vmem [resolvable:$true] %s153
          %159 = dma.hbm_to_vmem [thread:$0]  %s1, 256, %s154, [#allocation7], 64, 64, 4
        $region16: #{tpu_custom_call.1} parent=11 // pred_fallthru
          _
        // Predicated region
        $region17: #{tpu_custom_call.1} parent=11 // pred_check
          %p160 = pneg %p85
        $region18: #{tpu_custom_call.1} parent=11 // pred_check_branch
          %162 = sbr.rel (%p160) target = $region20
        $region19: #{tpu_custom_call.1} parent=11 // pred_region
          %s164 = ssub.s32 256, 256
          %165 = vsyncadd [#allocation7], %s164
          %s166 = sshll.u32 [#allocation8], 4
          %s167 = int_to_ptr.vmem [resolvable:$true] %s166
          %172 = dma.hbm_to_vmem [thread:$0]  %s2, 256, %s167, [#allocation7], 64, 64, 4
        $region20: #{tpu_custom_call.1} parent=11 // pred_fallthru
          _
        // Predicated region
        $region21: #{tpu_custom_call.1} parent=11 // pred_check
          %p173 = pneg %p106
        $region22: #{tpu_custom_call.1} parent=11 // pred_check_branch
          %175 = sbr.rel (%p173) target = $region24
        $region23: #{tpu_custom_call.1} parent=11 // pred_region
          _
        $region24: #{tpu_custom_call.1} parent=11 // pred_fallthru
          _
      $region12: #{tpu_custom_call.1} parent=5 // pred_fallthru
        _
      %p176 = scmp.lt.s32.totalorder %s17, 2
      // Predicated region
      $region25: #{tpu_custom_call.1} parent=5 // pred_check
        %p177 = pneg %p176
      $region26: #{tpu_custom_call.1} parent=5 // pred_check_branch
        %179 = sbr.rel (%p177) target = $region28
      $region27: #{tpu_custom_call.1} parent=5 // pred_region
        // Predicated region
        $region29: #{tpu_custom_call.1} parent=27 // pred_check
          %p180 = pneg %p37
        $region30: #{tpu_custom_call.1} parent=27 // pred_check_branch
          %182 = sbr.rel (%p180) target = $region32
        $region31: #{tpu_custom_call.1} parent=27 // pred_region
          %s183 = sand.u32 %s27, 1
          %s184 = scalar_lea.sflag [#allocation4], %s183
          %s185 = sand.u32 %s27, 1
          %s186 = smul.addr %s185, 4
          %s187 = scalar_lea.vmem [#allocation3], %s186
          %s189 = ssub.s32 64, 64
          %190 = vsyncadd %s184, %s189
          %s191 = smul.addr %s17, 64
          %s192 = scalar_lea.hbm %s0, %s191
          %s194 = sshll.u32 %s187, 4
          %s195 = int_to_ptr.vmem [resolvable:$true] %s194
          %197 = dma.hbm_to_vmem [thread:$0]  %s192, 64, %s195, %s184
        $region32: #{tpu_custom_call.1} parent=27 // pred_fallthru
          _
      $region28: #{tpu_custom_call.1} parent=5 // pred_fallthru
        _
      %p198 = scmp.le.s32.totalorder 1, %s17
      %p199 = scmp.lt.s32.totalorder %s17, 3
      %p200 = pnand %p198, %p199
      %p201 = pneg %p200
      // Predicated region
      $region33: #{tpu_custom_call.1} parent=5 // pred_check
        _
      $region34: #{tpu_custom_call.1} parent=5 // pred_check_branch
        %203 = sbr.rel (%p200) target = $region36
      $region35: #{tpu_custom_call.1} parent=5 // pred_region
        %s204 = ssub.s32 %s17, 1
        %s205 = sand.u32 %s30, 1
        %s206 = scalar_lea.sflag [#allocation4], %s205
        %s207 = sand.u32 %s30, 1
        %s208 = smul.addr %s207, 4
        %s209 = scalar_lea.vmem [#allocation3], %s208
        // Predicated region
        $region37: #{tpu_custom_call.1} parent=35 // pred_check
          %p210 = pneg %p43
        $region38: #{tpu_custom_call.1} parent=35 // pred_check_branch
          %212 = sbr.rel (%p210) target = $region40
        $region39: #{tpu_custom_call.1} parent=35 // pred_region
          %213 = dma.done %s206, 64
        $region40: #{tpu_custom_call.1} parent=35 // pred_fallthru
          _
        // Predicated region
        $region41: #{tpu_custom_call.1} parent=35 // pred_check
          %p214 = pneg %p64
        $region42: #{tpu_custom_call.1} parent=35 // pred_check_branch
          %216 = sbr.rel (%p214) target = $region44
        $region43: #{tpu_custom_call.1} parent=35 // pred_region
          %217 = dma.done [#allocation7], 256
        $region44: #{tpu_custom_call.1} parent=35 // pred_fallthru
          _
        // Predicated region
        $region45: #{tpu_custom_call.1} parent=35 // pred_check
          %p218 = pneg %p85
        $region46: #{tpu_custom_call.1} parent=35 // pred_check_branch
          %220 = sbr.rel (%p218) target = $region48
        $region47: #{tpu_custom_call.1} parent=35 // pred_region
          %221 = dma.done [#allocation7], 256
        $region48: #{tpu_custom_call.1} parent=35 // pred_fallthru
          _
        %s222 = sand.u32 %s30, 1
        %s223 = scalar_lea.sflag [#allocation4], %s222
        %s224 = sand.u32 %s30, 1
        %s225 = smul.addr %s224, 4
        %s226 = scalar_lea.vmem [#allocation3], %s225
        %p227 = pneg %p43
        %p228 = pneg %p40
        %p229 = pneg %p64
        %p230 = pneg %p61
        %p231 = pneg %p85
        %p232 = pneg %p82
        %p233 = pneg %p106
        %p234 = pneg %p103
        %p235 = pneg %p132
        %p236 = pneg %p129
        %s237 = sand.u32 %s119, 1
        %s238 = scalar_lea.sflag [#allocation5], %s237
        %s239 = sand.u32 %s119, 1
        %s240 = smul.addr %s239, 8
        %s241 = scalar_lea.vmem [#allocation9], %s240
        %v243 = vld [vmem:[%s209] sm:$0xf]
        %v244 = vld [vmem:[#allocation6] sm:$0xf]
        %v245 = vld [vmem:[#allocation6 + $0x4] sm:$0xf]
        %v246 = vld [vmem:[#allocation6 + $0x8] sm:$0xf]
        %v247 = vld [vmem:[#allocation6 + $0xc] sm:$0xf]
        %v252 = vunpack.c.l.b16 %v244
        %v253 = vunpack.c.l.b16 %v245
        %v254 = vunpack.c.l.b16 %v246
        %v255 = vunpack.c.l.b16 %v247
        %v256 = vpack.c.b16 %v253, %v252
        %v257 = vpack.c.b16 %v255, %v254
        %vm260 = vcmask 261120
        %v262 = vsel %vm260, %v243, 0
        %264 = vmatprep.subr.bf16.mxu0 0
        %265 = vmatpush1.bf16.msra.mxu0 0
        %266 = vmatprep.subr.bf16.mxu0 0
        %267 = vmatpush1.bf16.msra.mxu0 0
        %268 = vmatprep.subr.bf16.mxu0 0
        %269 = vmatpush1.bf16.msra.mxu0 0
        %270 = vmatprep.subr.bf16.mxu0 0
        %271 = vmatpush1.bf16.msra.mxu0 0
        %272 = vmatprep.subr.bf16.mxu0 0
        %273 = vmatpush1.bf16.msra.mxu0 0
        %274 = vmatprep.subr.bf16.mxu0 0
        %275 = vmatpush1.bf16.msra.mxu0 0
        %276 = vmatprep.subr.bf16.mxu0 0
        %277 = vmatpush1.bf16.msra.mxu0 %v257
        %278 = vmatprep.subr.bf16.mxu0 0
        %279 = vmatpush1.bf16.msra.mxu0 %v256
        %280 = vmatprep.subr.bf16.mxu0 0
        %281 = vmatpush2.bf16.msra.mxu0 0
        %282 = vmatprep.subr.bf16.mxu0 0
        %283 = vmatpush2.bf16.msra.mxu0 0
        %284 = vmatprep.subr.bf16.mxu0 0
        %285 = vmatpush2.bf16.msra.mxu0 0
        %286 = vmatprep.subr.bf16.mxu0 0
        %287 = vmatpush2.bf16.msra.mxu0 0
        %288 = vmatprep.subr.bf16.mxu0 0
        %289 = vmatpush2.bf16.msra.mxu0 0
        %290 = vmatprep.subr.bf16.mxu0 0
        %291 = vmatpush2.bf16.msra.mxu0 0
        %292 = vmatprep.subr.bf16.mxu0 0
        %293 = vmatpush2.bf16.msra.mxu0 0
        %294 = vmatprep.subr.bf16.mxu0 0
        %295 = vmatpush2.bf16.msra.mxu0 0
        %296 = vmatprep.mubr.bf16.mxu0 0
        %297 = vmatmul.mubr.bf16.gmra.mxu0 %v262
        %v298 = vpop.f32.mrf.mxu0
        %v299 = vadd.f32 0.0, %v298
        %v300 = vpop.f32.mrf.mxu0
        %v301 = vpop.f32.mrf.mxu0
        %v302 = vpop.f32.mrf.mxu0
        %303 = vdwg.mxu0
        %v304 = vpack.c.bf16 %v299, %v299
        %v305 = vlaneseq
        %v306 = vshrl.u32 %v305, 7
        %v307 = vlaneseq
        %v308 = vand.u32 %v307, 127
        %vm309 = vcmp.ge.s32.totalorder %v306, %v308
        %v310 = vsel %vm309, 0.0, -1e+30
        %312 = vrot.lane.b32.xlu0 %v304, 96
        %v313 = vpop.permute.xlu0 %312
        %vm314 = vcmask 64512
        %v316 = vsel %vm314, %v304, 0
        %v319 = vsel %vm314, %v313, 0
        %321 = vmatprep.subr.bf16.mxu0 0
        %322 = vmatpush1.bf16.xpose.msra.mxu0 0
        %323 = vmatprep.subr.bf16.mxu0 0
        %324 = vmatpush1.bf16.xpose.msra.mxu0 0
        %325 = vmatprep.subr.bf16.mxu0 0
        %326 = vmatpush1.bf16.xpose.msra.mxu0 0
        %327 = vmatprep.subr.bf16.mxu0 0
        %328 = vmatpush1.bf16.xpose.msra.mxu0 0
        %329 = vmatprep.subr.bf16.mxu0 0
        %330 = vmatpush1.bf16.xpose.msra.mxu0 0
        %331 = vmatprep.subr.bf16.mxu0 0
        %332 = vmatpush1.bf16.xpose.msra.mxu0 0
        %333 = vmatprep.subr.bf16.mxu0 0
        %334 = vmatpush1.bf16.xpose.msra.mxu0 0
        %335 = vmatprep.subr.bf16.mxu0 0
        %336 = vmatpush1.bf16.xpose.msra.mxu0 %v319
        %337 = vmatprep.subr.bf16.mxu0 0
        %338 = vmatpush2.bf16.xpose.msra.mxu0 0
        %339 = vmatprep.subr.bf16.mxu0 0
        %340 = vmatpush2.bf16.xpose.msra.mxu0 0
        %341 = vmatprep.subr.bf16.mxu0 0
        %342 = vmatpush2.bf16.xpose.msra.mxu0 0
        %343 = vmatprep.subr.bf16.mxu0 0
        %344 = vmatpush2.bf16.xpose.msra.mxu0 0
        %345 = vmatprep.subr.bf16.mxu0 0
        %346 = vmatpush2.bf16.xpose.msra.mxu0 0
        %347 = vmatprep.subr.bf16.mxu0 0
        %348 = vmatpush2.bf16.xpose.msra.mxu0 0
        %349 = vmatprep.subr.bf16.mxu0 0
        %350 = vmatpush2.bf16.xpose.msra.mxu0 0
        %351 = vmatprep.subr.bf16.mxu0 0
        %352 = vmatpush2.bf16.xpose.msra.mxu0 0
        %353 = vmatprep.mubr.bf16.mxu0 0
        %354 = vmatmul.mubr.bf16.gmra.mxu0 %v316
        %v355 = vpop.f32.mrf.mxu0
        %v356 = vadd.f32 %v310, %v355
        %v357 = vpop.f32.mrf.mxu0
        %v358 = vpop.f32.mrf.mxu0
        %v359 = vpop.f32.mrf.mxu0
        %360 = vdwg.mxu0
        %v361 = vsel %vm314, %v356, -inf
        %362 = vmax.xlane.f32.xlu0 %v361
        %v363 = vpop.xlane.xlu0 %362
        %v364 = vsub.f32 %v356, %v363
        %v365 = vmul.f32 %v364, 1.442695
        %v366 = vpow.pop %v365
        %v367 = vsel %vm314, %v366, 0.0
        %368 = vadd.xlane.f32.xlu0 %v367
        %v369 = vpop.xlane.xlu0 %368
        %v370 = vrcp.pop %v369
        %v371 = vmul.f32 %v366, %v370
        %v372 = vpack.c.bf16 %v371, %v371
        %373 = vrot.lane.b32.xlu0 %v304, 64
        %v374 = vpop.permute.xlu0 %373
        %v376 = vsel %vm314, %v372, 0
        %vm378 = vcmask 1043456
        %v380 = vsel %vm378, %v374, 0
        %382 = vmatprep.subr.bf16.mxu0 0
        %383 = vmatpush1.bf16.msra.mxu0 0
        %384 = vmatprep.subr.bf16.mxu0 0
        %385 = vmatpush1.bf16.msra.mxu0 0
        %386 = vmatprep.subr.bf16.mxu0 0
        %387 = vmatpush1.bf16.msra.mxu0 0
        %388 = vmatprep.subr.bf16.mxu0 0
        %389 = vmatpush1.bf16.msra.mxu0 0
        %390 = vmatprep.subr.bf16.mxu0 0
        %391 = vmatpush1.bf16.msra.mxu0 0
        %392 = vmatprep.subr.bf16.mxu0 0
        %393 = vmatpush1.bf16.msra.mxu0 0
        %394 = vmatprep.subr.bf16.mxu0 0
        %395 = vmatpush1.bf16.msra.mxu0 0
        %396 = vmatprep.subr.bf16.mxu0 0
        %397 = vmatpush1.bf16.msra.mxu0 %v380
        %398 = vmatprep.subr.bf16.mxu0 0
        %399 = vmatpush2.bf16.msra.mxu0 0
        %400 = vmatprep.subr.bf16.mxu0 0
        %401 = vmatpush2.bf16.msra.mxu0 0
        %402 = vmatprep.subr.bf16.mxu0 0
        %403 = vmatpush2.bf16.msra.mxu0 0
        %404 = vmatprep.subr.bf16.mxu0 0
        %405 = vmatpush2.bf16.msra.mxu0 0
        %406 = vmatprep.subr.bf16.mxu0 0
        %407 = vmatpush2.bf16.msra.mxu0 0
        %408 = vmatprep.subr.bf16.mxu0 0
        %409 = vmatpush2.bf16.msra.mxu0 0
        %410 = vmatprep.subr.bf16.mxu0 0
        %411 = vmatpush2.bf16.msra.mxu0 0
        %412 = vmatprep.subr.bf16.mxu0 0
        %413 = vmatpush2.bf16.msra.mxu0 0
        %414 = vmatprep.mubr.bf16.mxu0 0
        %415 = vmatmul.mubr.bf16.gmra.mxu0 %v376
        %v416 = vpop.f32.mrf.mxu0
        %v417 = vadd.f32 0.0, %v416
        %v418 = vpop.f32.mrf.mxu0
        %v419 = vpop.f32.mrf.mxu0
        %v420 = vpop.f32.mrf.mxu0
        %421 = vdwg.mxu0
        %v422 = vpack.c.bf16 %v417, %v417
        %v423 = vld [vmem:[#allocation8] sm:$0xf]
        %v425 = vsel %vm314, %v422, 0
        %v428 = vsel %vm378, %v423, 0
        %430 = vmatprep.subr.bf16.mxu0 0
        %431 = vmatpush1.bf16.msra.mxu0 0
        %432 = vmatprep.subr.bf16.mxu0 0
        %433 = vmatpush1.bf16.msra.mxu0 0
        %434 = vmatprep.subr.bf16.mxu0 0
        %435 = vmatpush1.bf16.msra.mxu0 0
        %436 = vmatprep.subr.bf16.mxu0 0
        %437 = vmatpush1.bf16.msra.mxu0 0
        %438 = vmatprep.subr.bf16.mxu0 0
        %439 = vmatpush1.bf16.msra.mxu0 0
        %440 = vmatprep.subr.bf16.mxu0 0
        %441 = vmatpush1.bf16.msra.mxu0 0
        %442 = vmatprep.subr.bf16.mxu0 0
        %443 = vmatpush1.bf16.msra.mxu0 0
        %444 = vmatprep.subr.bf16.mxu0 0
        %445 = vmatpush1.bf16.msra.mxu0 %v428
        %446 = vmatprep.subr.bf16.mxu0 0
        %447 = vmatpush2.bf16.msra.mxu0 0
        %448 = vmatprep.subr.bf16.mxu0 0
        %449 = vmatpush2.bf16.msra.mxu0 0
        %450 = vmatprep.subr.bf16.mxu0 0
        %451 = vmatpush2.bf16.msra.mxu0 0
        %452 = vmatprep.subr.bf16.mxu0 0
        %453 = vmatpush2.bf16.msra.mxu0 0
        %454 = vmatprep.subr.bf16.mxu0 0
        %455 = vmatpush2.bf16.msra.mxu0 0
        %456 = vmatprep.subr.bf16.mxu0 0
        %457 = vmatpush2.bf16.msra.mxu0 0
        %458 = vmatprep.subr.bf16.mxu0 0
        %459 = vmatpush2.bf16.msra.mxu0 0
        %460 = vmatprep.subr.bf16.mxu0 0
        %461 = vmatpush2.bf16.msra.mxu0 0
        %462 = vmatprep.mubr.bf16.mxu0 0
        %463 = vmatmul.mubr.bf16.gmra.mxu0 %v425
        %v464 = vpop.f32.mrf.mxu0
        %v465 = vadd.f32 0.0, %v464
        %v466 = vpop.f32.mrf.mxu0
        %v467 = vpop.f32.mrf.mxu0
        %v468 = vpop.f32.mrf.mxu0
        %469 = vdwg.mxu0
        %470 = vst.msk [vmem:[#allocation2] sm:$0xff] %vm260, %v465
        %471 = vrot.lane.b32.xlu0 %v304, 120
        %v472 = vpop.permute.xlu0 %471
        %473 = vrot.lane.b32.xlu0 %v304, 88
        %v474 = vpop.permute.xlu0 %473
        %v476 = vsel %vm314, %v472, 0
        %v479 = vsel %vm314, %v474, 0
        %481 = vmatprep.subr.bf16.mxu0 0
        %482 = vmatpush1.bf16.xpose.msra.mxu0 0
        %483 = vmatprep.subr.bf16.mxu0 0
        %484 = vmatpush1.bf16.xpose.msra.mxu0 0
        %485 = vmatprep.subr.bf16.mxu0 0
        %486 = vmatpush1.bf16.xpose.msra.mxu0 0
        %487 = vmatprep.subr.bf16.mxu0 0
        %488 = vmatpush1.bf16.xpose.msra.mxu0 0
        %489 = vmatprep.subr.bf16.mxu0 0
        %490 = vmatpush1.bf16.xpose.msra.mxu0 0
        %491 = vmatprep.subr.bf16.mxu0 0
        %492 = vmatpush1.bf16.xpose.msra.mxu0 0
        %493 = vmatprep.subr.bf16.mxu0 0
        %494 = vmatpush1.bf16.xpose.msra.mxu0 0
        %495 = vmatprep.subr.bf16.mxu0 0
        %496 = vmatpush1.bf16.xpose.msra.mxu0 %v479
        %497 = vmatprep.subr.bf16.mxu0 0
        %498 = vmatpush2.bf16.xpose.msra.mxu0 0
        %499 = vmatprep.subr.bf16.mxu0 0
        %500 = vmatpush2.bf16.xpose.msra.mxu0 0
        %501 = vmatprep.subr.bf16.mxu0 0
        %502 = vmatpush2.bf16.xpose.msra.mxu0 0
        %503 = vmatprep.subr.bf16.mxu0 0
        %504 = vmatpush2.bf16.xpose.msra.mxu0 0
        %505 = vmatprep.subr.bf16.mxu0 0
        %506 = vmatpush2.bf16.xpose.msra.mxu0 0
        %507 = vmatprep.subr.bf16.mxu0 0
        %508 = vmatpush2.bf16.xpose.msra.mxu0 0
        %509 = vmatprep.subr.bf16.mxu0 0
        %510 = vmatpush2.bf16.xpose.msra.mxu0 0
        %511 = vmatprep.subr.bf16.mxu0 0
        %512 = vmatpush2.bf16.xpose.msra.mxu0 0
        %513 = vmatprep.mubr.bf16.mxu0 0
        %514 = vmatmul.mubr.bf16.gmra.mxu0 %v476
        %v515 = vpop.f32.mrf.mxu0
        %v516 = vadd.f32 %v310, %v515
        %v517 = vpop.f32.mrf.mxu0
        %v518 = vpop.f32.mrf.mxu0
        %v519 = vpop.f32.mrf.mxu0
        %520 = vdwg.mxu0
        %v521 = vsel %vm314, %v516, -inf
        %522 = vmax.xlane.f32.xlu0 %v521
        %v523 = vpop.xlane.xlu0 %522
        %v524 = vsub.f32 %v516, %v523
        %v525 = vmul.f32 %v524, 1.442695
        %v526 = vpow.pop %v525
        %v527 = vsel %vm314, %v526, 0.0
        %528 = vadd.xlane.f32.xlu0 %v527
        %v529 = vpop.xlane.xlu0 %528
        %v530 = vrcp.pop %v529
        %v531 = vmul.f32 %v526, %v530
        %v532 = vpack.c.bf16 %v531, %v531
        %533 = vrot.lane.b32.xlu0 %v304, 56
        %v534 = vpop.permute.xlu0 %533
        %v536 = vsel %vm314, %v532, 0
        %v539 = vsel %vm378, %v534, 0
        %541 = vmatprep.subr.bf16.mxu0 0
        %542 = vmatpush1.bf16.msra.mxu0 0
        %543 = vmatprep.subr.bf16.mxu0 0
        %544 = vmatpush1.bf16.msra.mxu0 0
        %545 = vmatprep.subr.bf16.mxu0 0
        %546 = vmatpush1.bf16.msra.mxu0 0
        %547 = vmatprep.subr.bf16.mxu0 0
        %548 = vmatpush1.bf16.msra.mxu0 0
        %549 = vmatprep.subr.bf16.mxu0 0
        %550 = vmatpush1.bf16.msra.mxu0 0
        %551 = vmatprep.subr.bf16.mxu0 0
        %552 = vmatpush1.bf16.msra.mxu0 0
        %553 = vmatprep.subr.bf16.mxu0 0
        %554 = vmatpush1.bf16.msra.mxu0 0
        %555 = vmatprep.subr.bf16.mxu0 0
        %556 = vmatpush1.bf16.msra.mxu0 %v539
        %557 = vmatprep.subr.bf16.mxu0 0
        %558 = vmatpush2.bf16.msra.mxu0 0
        %559 = vmatprep.subr.bf16.mxu0 0
        %560 = vmatpush2.bf16.msra.mxu0 0
        %561 = vmatprep.subr.bf16.mxu0 0
        %562 = vmatpush2.bf16.msra.mxu0 0
        %563 = vmatprep.subr.bf16.mxu0 0
        %564 = vmatpush2.bf16.msra.mxu0 0
        %565 = vmatprep.subr.bf16.mxu0 0
        %566 = vmatpush2.bf16.msra.mxu0 0
        %567 = vmatprep.subr.bf16.mxu0 0
        %568 = vmatpush2.bf16.msra.mxu0 0
        %569 = vmatprep.subr.bf16.mxu0 0
        %570 = vmatpush2.bf16.msra.mxu0 0
        %571 = vmatprep.subr.bf16.mxu0 0
        %572 = vmatpush2.bf16.msra.mxu0 0
        %573 = vmatprep.mubr.bf16.mxu0 0
        %574 = vmatmul.mubr.bf16.gmra.mxu0 %v536
        %v575 = vpop.f32.mrf.mxu0
        %v576 = vadd.f32 0.0, %v575
        %v577 = vpop.f32.mrf.mxu0
        %v578 = vpop.f32.mrf.mxu0
        %v579 = vpop.f32.mrf.mxu0
        %580 = vdwg.mxu0
        %v581 = vpack.c.bf16 %v576, %v576
        %v582 = vld [vmem:[#allocation8 + $0x4] sm:$0xf]
        %v584 = vsel %vm314, %v581, 0
        %v587 = vsel %vm378, %v582, 0
        %589 = vmatprep.subr.bf16.mxu0 0
        %590 = vmatpush1.bf16.msra.mxu0 0
        %591 = vmatprep.subr.bf16.mxu0 0
        %592 = vmatpush1.bf16.msra.mxu0 0
        %593 = vmatprep.subr.bf16.mxu0 0
        %594 = vmatpush1.bf16.msra.mxu0 0
        %595 = vmatprep.subr.bf16.mxu0 0
        %596 = vmatpush1.bf16.msra.mxu0 0
        %597 = vmatprep.subr.bf16.mxu0 0
        %598 = vmatpush1.bf16.msra.mxu0 0
        %599 = vmatprep.subr.bf16.mxu0 0
        %600 = vmatpush1.bf16.msra.mxu0 0
        %601 = vmatprep.subr.bf16.mxu0 0
        %602 = vmatpush1.bf16.msra.mxu0 0
        %603 = vmatprep.subr.bf16.mxu0 0
        %604 = vmatpush1.bf16.msra.mxu0 %v587
        %605 = vmatprep.subr.bf16.mxu0 0
        %606 = vmatpush2.bf16.msra.mxu0 0
        %607 = vmatprep.subr.bf16.mxu0 0
        %608 = vmatpush2.bf16.msra.mxu0 0
        %609 = vmatprep.subr.bf16.mxu0 0
        %610 = vmatpush2.bf16.msra.mxu0 0
        %611 = vmatprep.subr.bf16.mxu0 0
        %612 = vmatpush2.bf16.msra.mxu0 0
        %613 = vmatprep.subr.bf16.mxu0 0
        %614 = vmatpush2.bf16.msra.mxu0 0
        %615 = vmatprep.subr.bf16.mxu0 0
        %616 = vmatpush2.bf16.msra.mxu0 0
        %617 = vmatprep.subr.bf16.mxu0 0
        %618 = vmatpush2.bf16.msra.mxu0 0
        %619 = vmatprep.subr.bf16.mxu0 0
        %620 = vmatpush2.bf16.msra.mxu0 0
        %621 = vmatprep.mubr.bf16.mxu0 0
        %622 = vmatmul.mubr.bf16.gmra.mxu0 %v584
        %v623 = vpop.f32.mrf.mxu0
        %v624 = vadd.f32 0.0, %v623
        %v625 = vpop.f32.mrf.mxu0
        %v626 = vpop.f32.mrf.mxu0
        %v627 = vpop.f32.mrf.mxu0
        %628 = vdwg.mxu0
        %v629 = vld [vmem:[#allocation2] sm:$0xff]
        %v630 = vadd.f32 %v629, %v624
        %631 = vst.msk [vmem:[#allocation2] sm:$0xff] %vm260, %v630
        %632 = vrot.lane.b32.xlu0 %v304, 112
        %v633 = vpop.permute.xlu0 %632
        %634 = vrot.lane.b32.xlu0 %v304, 80
        %v635 = vpop.permute.xlu0 %634
        %v637 = vsel %vm314, %v633, 0
        %v640 = vsel %vm314, %v635, 0
        %642 = vmatprep.subr.bf16.mxu0 0
        %643 = vmatpush1.bf16.xpose.msra.mxu0 0
        %644 = vmatprep.subr.bf16.mxu0 0
        %645 = vmatpush1.bf16.xpose.msra.mxu0 0
        %646 = vmatprep.subr.bf16.mxu0 0
        %647 = vmatpush1.bf16.xpose.msra.mxu0 0
        %648 = vmatprep.subr.bf16.mxu0 0
        %649 = vmatpush1.bf16.xpose.msra.mxu0 0
        %650 = vmatprep.subr.bf16.mxu0 0
        %651 = vmatpush1.bf16.xpose.msra.mxu0 0
        %652 = vmatprep.subr.bf16.mxu0 0
        %653 = vmatpush1.bf16.xpose.msra.mxu0 0
        %654 = vmatprep.subr.bf16.mxu0 0
        %655 = vmatpush1.bf16.xpose.msra.mxu0 0
        %656 = vmatprep.subr.bf16.mxu0 0
        %657 = vmatpush1.bf16.xpose.msra.mxu0 %v640
        %658 = vmatprep.subr.bf16.mxu0 0
        %659 = vmatpush2.bf16.xpose.msra.mxu0 0
        %660 = vmatprep.subr.bf16.mxu0 0
        %661 = vmatpush2.bf16.xpose.msra.mxu0 0
        %662 = vmatprep.subr.bf16.mxu0 0
        %663 = vmatpush2.bf16.xpose.msra.mxu0 0
        %664 = vmatprep.subr.bf16.mxu0 0
        %665 = vmatpush2.bf16.xpose.msra.mxu0 0
        %666 = vmatprep.subr.bf16.mxu0 0
        %667 = vmatpush2.bf16.xpose.msra.mxu0 0
        %668 = vmatprep.subr.bf16.mxu0 0
        %669 = vmatpush2.bf16.xpose.msra.mxu0 0
        %670 = vmatprep.subr.bf16.mxu0 0
        %671 = vmatpush2.bf16.xpose.msra.mxu0 0
        %672 = vmatprep.subr.bf16.mxu0 0
        %673 = vmatpush2.bf16.xpose.msra.mxu0 0
        %674 = vmatprep.mubr.bf16.mxu0 0
        %675 = vmatmul.mubr.bf16.gmra.mxu0 %v637
        %v676 = vpop.f32.mrf.mxu0
        %v677 = vadd.f32 %v310, %v676
        %v678 = vpop.f32.mrf.mxu0
        %v679 = vpop.f32.mrf.mxu0
        %v680 = vpop.f32.mrf.mxu0
        %681 = vdwg.mxu0
        %v682 = vsel %vm314, %v677, -inf
        %683 = vmax.xlane.f32.xlu0 %v682
        %v684 = vpop.xlane.xlu0 %683
        %v685 = vsub.f32 %v677, %v684
        %v686 = vmul.f32 %v685, 1.442695
        %v687 = vpow.pop %v686
        %v688 = vsel %vm314, %v687, 0.0
        %689 = vadd.xlane.f32.xlu0 %v688
        %v690 = vpop.xlane.xlu0 %689
        %v691 = vrcp.pop %v690
        %v692 = vmul.f32 %v687, %v691
        %v693 = vpack.c.bf16 %v692, %v692
        %694 = vrot.lane.b32.xlu0 %v304, 48
        %v695 = vpop.permute.xlu0 %694
        %v697 = vsel %vm314, %v693, 0
        %v700 = vsel %vm378, %v695, 0
        %702 = vmatprep.subr.bf16.mxu0 0
        %703 = vmatpush1.bf16.msra.mxu0 0
        %704 = vmatprep.subr.bf16.mxu0 0
        %705 = vmatpush1.bf16.msra.mxu0 0
        %706 = vmatprep.subr.bf16.mxu0 0
        %707 = vmatpush1.bf16.msra.mxu0 0
        %708 = vmatprep.subr.bf16.mxu0 0
        %709 = vmatpush1.bf16.msra.mxu0 0
        %710 = vmatprep.subr.bf16.mxu0 0
        %711 = vmatpush1.bf16.msra.mxu0 0
        %712 = vmatprep.subr.bf16.mxu0 0
        %713 = vmatpush1.bf16.msra.mxu0 0
        %714 = vmatprep.subr.bf16.mxu0 0
        %715 = vmatpush1.bf16.msra.mxu0 0
        %716 = vmatprep.subr.bf16.mxu0 0
        %717 = vmatpush1.bf16.msra.mxu0 %v700
        %718 = vmatprep.subr.bf16.mxu0 0
        %719 = vmatpush2.bf16.msra.mxu0 0
        %720 = vmatprep.subr.bf16.mxu0 0
        %721 = vmatpush2.bf16.msra.mxu0 0
        %722 = vmatprep.subr.bf16.mxu0 0
        %723 = vmatpush2.bf16.msra.mxu0 0
        %724 = vmatprep.subr.bf16.mxu0 0
        %725 = vmatpush2.bf16.msra.mxu0 0
        %726 = vmatprep.subr.bf16.mxu0 0
        %727 = vmatpush2.bf16.msra.mxu0 0
        %728 = vmatprep.subr.bf16.mxu0 0
        %729 = vmatpush2.bf16.msra.mxu0 0
        %730 = vmatprep.subr.bf16.mxu0 0
        %731 = vmatpush2.bf16.msra.mxu0 0
        %732 = vmatprep.subr.bf16.mxu0 0
        %733 = vmatpush2.bf16.msra.mxu0 0
        %734 = vmatprep.mubr.bf16.mxu0 0
        %735 = vmatmul.mubr.bf16.gmra.mxu0 %v697
        %v736 = vpop.f32.mrf.mxu0
        %v737 = vadd.f32 0.0, %v736
        %v738 = vpop.f32.mrf.mxu0
        %v739 = vpop.f32.mrf.mxu0
        %v740 = vpop.f32.mrf.mxu0
        %741 = vdwg.mxu0
        %v742 = vpack.c.bf16 %v737, %v737
        %v743 = vld [vmem:[#allocation8 + $0x8] sm:$0xf]
        %v745 = vsel %vm314, %v742, 0
        %v748 = vsel %vm378, %v743, 0
        %750 = vmatprep.subr.bf16.mxu0 0
        %751 = vmatpush1.bf16.msra.mxu0 0
        %752 = vmatprep.subr.bf16.mxu0 0
        %753 = vmatpush1.bf16.msra.mxu0 0
        %754 = vmatprep.subr.bf16.mxu0 0
        %755 = vmatpush1.bf16.msra.mxu0 0
        %756 = vmatprep.subr.bf16.mxu0 0
        %757 = vmatpush1.bf16.msra.mxu0 0
        %758 = vmatprep.subr.bf16.mxu0 0
        %759 = vmatpush1.bf16.msra.mxu0 0
        %760 = vmatprep.subr.bf16.mxu0 0
        %761 = vmatpush1.bf16.msra.mxu0 0
        %762 = vmatprep.subr.bf16.mxu0 0
        %763 = vmatpush1.bf16.msra.mxu0 0
        %764 = vmatprep.subr.bf16.mxu0 0
        %765 = vmatpush1.bf16.msra.mxu0 %v748
        %766 = vmatprep.subr.bf16.mxu0 0
        %767 = vmatpush2.bf16.msra.mxu0 0
        %768 = vmatprep.subr.bf16.mxu0 0
        %769 = vmatpush2.bf16.msra.mxu0 0
        %770 = vmatprep.subr.bf16.mxu0 0
        %771 = vmatpush2.bf16.msra.mxu0 0
        %772 = vmatprep.subr.bf16.mxu0 0
        %773 = vmatpush2.bf16.msra.mxu0 0
        %774 = vmatprep.subr.bf16.mxu0 0
        %775 = vmatpush2.bf16.msra.mxu0 0
        %776 = vmatprep.subr.bf16.mxu0 0
        %777 = vmatpush2.bf16.msra.mxu0 0
        %778 = vmatprep.subr.bf16.mxu0 0
        %779 = vmatpush2.bf16.msra.mxu0 0
        %780 = vmatprep.subr.bf16.mxu0 0
        %781 = vmatpush2.bf16.msra.mxu0 0
        %782 = vmatprep.mubr.bf16.mxu0 0
        %783 = vmatmul.mubr.bf16.gmra.mxu0 %v745
        %v784 = vpop.f32.mrf.mxu0
        %v785 = vadd.f32 0.0, %v784
        %v786 = vpop.f32.mrf.mxu0
        %v787 = vpop.f32.mrf.mxu0
        %v788 = vpop.f32.mrf.mxu0
        %789 = vdwg.mxu0
        %v790 = vld [vmem:[#allocation2] sm:$0xff]
        %v791 = vadd.f32 %v790, %v785
        %792 = vst.msk [vmem:[#allocation2] sm:$0xff] %vm260, %v791
        %793 = vrot.lane.b32.xlu0 %v304, 104
        %v794 = vpop.permute.xlu0 %793
        %795 = vrot.lane.b32.xlu0 %v304, 72
        %v796 = vpop.permute.xlu0 %795
        %v798 = vsel %vm314, %v794, 0
        %v801 = vsel %vm314, %v796, 0
        %803 = vmatprep.subr.bf16.mxu0 0
        %804 = vmatpush1.bf16.xpose.msra.mxu0 0
        %805 = vmatprep.subr.bf16.mxu0 0
        %806 = vmatpush1.bf16.xpose.msra.mxu0 0
        %807 = vmatprep.subr.bf16.mxu0 0
        %808 = vmatpush1.bf16.xpose.msra.mxu0 0
        %809 = vmatprep.subr.bf16.mxu0 0
        %810 = vmatpush1.bf16.xpose.msra.mxu0 0
        %811 = vmatprep.subr.bf16.mxu0 0
        %812 = vmatpush1.bf16.xpose.msra.mxu0 0
        %813 = vmatprep.subr.bf16.mxu0 0
        %814 = vmatpush1.bf16.xpose.msra.mxu0 0
        %815 = vmatprep.subr.bf16.mxu0 0
        %816 = vmatpush1.bf16.xpose.msra.mxu0 0
        %817 = vmatprep.subr.bf16.mxu0 0
        %818 = vmatpush1.bf16.xpose.msra.mxu0 %v801
        %819 = vmatprep.subr.bf16.mxu0 0
        %820 = vmatpush2.bf16.xpose.msra.mxu0 0
        %821 = vmatprep.subr.bf16.mxu0 0
        %822 = vmatpush2.bf16.xpose.msra.mxu0 0
        %823 = vmatprep.subr.bf16.mxu0 0
        %824 = vmatpush2.bf16.xpose.msra.mxu0 0
        %825 = vmatprep.subr.bf16.mxu0 0
        %826 = vmatpush2.bf16.xpose.msra.mxu0 0
        %827 = vmatprep.subr.bf16.mxu0 0
        %828 = vmatpush2.bf16.xpose.msra.mxu0 0
        %829 = vmatprep.subr.bf16.mxu0 0
        %830 = vmatpush2.bf16.xpose.msra.mxu0 0
        %831 = vmatprep.subr.bf16.mxu0 0
        %832 = vmatpush2.bf16.xpose.msra.mxu0 0
        %833 = vmatprep.subr.bf16.mxu0 0
        %834 = vmatpush2.bf16.xpose.msra.mxu0 0
        %835 = vmatprep.mubr.bf16.mxu0 0
        %836 = vmatmul.mubr.bf16.gmra.mxu0 %v798
        %v837 = vpop.f32.mrf.mxu0
        %v838 = vadd.f32 %v310, %v837
        %v839 = vpop.f32.mrf.mxu0
        %v840 = vpop.f32.mrf.mxu0
        %v841 = vpop.f32.mrf.mxu0
        %842 = vdwg.mxu0
        %v843 = vsel %vm314, %v838, -inf
        %844 = vmax.xlane.f32.xlu0 %v843
        %v845 = vpop.xlane.xlu0 %844
        %v846 = vsub.f32 %v838, %v845
        %v847 = vmul.f32 %v846, 1.442695
        %v848 = vpow.pop %v847
        %v849 = vsel %vm314, %v848, 0.0
        %850 = vadd.xlane.f32.xlu0 %v849
        %v851 = vpop.xlane.xlu0 %850
        %v852 = vrcp.pop %v851
        %v853 = vmul.f32 %v848, %v852
        %v854 = vpack.c.bf16 %v853, %v853
        %855 = vrot.lane.b32.xlu0 %v304, 40
        %v856 = vpop.permute.xlu0 %855
        %v858 = vsel %vm314, %v854, 0
        %v861 = vsel %vm378, %v856, 0
        %863 = vmatprep.subr.bf16.mxu0 0
        %864 = vmatpush1.bf16.msra.mxu0 0
        %865 = vmatprep.subr.bf16.mxu0 0
        %866 = vmatpush1.bf16.msra.mxu0 0
        %867 = vmatprep.subr.bf16.mxu0 0
        %868 = vmatpush1.bf16.msra.mxu0 0
        %869 = vmatprep.subr.bf16.mxu0 0
        %870 = vmatpush1.bf16.msra.mxu0 0
        %871 = vmatprep.subr.bf16.mxu0 0
        %872 = vmatpush1.bf16.msra.mxu0 0
        %873 = vmatprep.subr.bf16.mxu0 0
        %874 = vmatpush1.bf16.msra.mxu0 0
        %875 = vmatprep.subr.bf16.mxu0 0
        %876 = vmatpush1.bf16.msra.mxu0 0
        %877 = vmatprep.subr.bf16.mxu0 0
        %878 = vmatpush1.bf16.msra.mxu0 %v861
        %879 = vmatprep.subr.bf16.mxu0 0
        %880 = vmatpush2.bf16.msra.mxu0 0
        %881 = vmatprep.subr.bf16.mxu0 0
        %882 = vmatpush2.bf16.msra.mxu0 0
        %883 = vmatprep.subr.bf16.mxu0 0
        %884 = vmatpush2.bf16.msra.mxu0 0
        %885 = vmatprep.subr.bf16.mxu0 0
        %886 = vmatpush2.bf16.msra.mxu0 0
        %887 = vmatprep.subr.bf16.mxu0 0
        %888 = vmatpush2.bf16.msra.mxu0 0
        %889 = vmatprep.subr.bf16.mxu0 0
        %890 = vmatpush2.bf16.msra.mxu0 0
        %891 = vmatprep.subr.bf16.mxu0 0
        %892 = vmatpush2.bf16.msra.mxu0 0
        %893 = vmatprep.subr.bf16.mxu0 0
        %894 = vmatpush2.bf16.msra.mxu0 0
        %895 = vmatprep.mubr.bf16.mxu0 0
        %896 = vmatmul.mubr.bf16.gmra.mxu0 %v858
        %v897 = vpop.f32.mrf.mxu0
        %v898 = vadd.f32 0.0, %v897
        %v899 = vpop.f32.mrf.mxu0
        %v900 = vpop.f32.mrf.mxu0
        %v901 = vpop.f32.mrf.mxu0
        %902 = vdwg.mxu0
        %v903 = vpack.c.bf16 %v898, %v898
        %v904 = vld [vmem:[#allocation8 + $0xc] sm:$0xf]
        %v906 = vsel %vm314, %v903, 0
        %v909 = vsel %vm378, %v904, 0
        %911 = vmatprep.subr.bf16.mxu0 0
        %912 = vmatpush1.bf16.msra.mxu0 0
        %913 = vmatprep.subr.bf16.mxu0 0
        %914 = vmatpush1.bf16.msra.mxu0 0
        %915 = vmatprep.subr.bf16.mxu0 0
        %916 = vmatpush1.bf16.msra.mxu0 0
        %917 = vmatprep.subr.bf16.mxu0 0
        %918 = vmatpush1.bf16.msra.mxu0 0
        %919 = vmatprep.subr.bf16.mxu0 0
        %920 = vmatpush1.bf16.msra.mxu0 0
        %921 = vmatprep.subr.bf16.mxu0 0
        %922 = vmatpush1.bf16.msra.mxu0 0
        %923 = vmatprep.subr.bf16.mxu0 0
        %924 = vmatpush1.bf16.msra.mxu0 0
        %925 = vmatprep.subr.bf16.mxu0 0
        %926 = vmatpush1.bf16.msra.mxu0 %v909
        %927 = vmatprep.subr.bf16.mxu0 0
        %928 = vmatpush2.bf16.msra.mxu0 0
        %929 = vmatprep.subr.bf16.mxu0 0
        %930 = vmatpush2.bf16.msra.mxu0 0
        %931 = vmatprep.subr.bf16.mxu0 0
        %932 = vmatpush2.bf16.msra.mxu0 0
        %933 = vmatprep.subr.bf16.mxu0 0
        %934 = vmatpush2.bf16.msra.mxu0 0
        %935 = vmatprep.subr.bf16.mxu0 0
        %936 = vmatpush2.bf16.msra.mxu0 0
        %937 = vmatprep.subr.bf16.mxu0 0
        %938 = vmatpush2.bf16.msra.mxu0 0
        %939 = vmatprep.subr.bf16.mxu0 0
        %940 = vmatpush2.bf16.msra.mxu0 0
        %941 = vmatprep.subr.bf16.mxu0 0
        %942 = vmatpush2.bf16.msra.mxu0 0
        %943 = vmatprep.mubr.bf16.mxu0 0
        %944 = vmatmul.mubr.bf16.gmra.mxu0 %v906
        %v945 = vpop.f32.mrf.mxu0
        %v946 = vadd.f32 0.0, %v945
        %v947 = vpop.f32.mrf.mxu0
        %v948 = vpop.f32.mrf.mxu0
        %v949 = vpop.f32.mrf.mxu0
        %950 = vdwg.mxu0
        %v951 = vld [vmem:[#allocation2] sm:$0xff]
        %v952 = vadd.f32 %v951, %v946
        %953 = vst.msk [vmem:[#allocation2] sm:$0xff] %vm260, %v952
        %v954 = vld [vmem:[#allocation2] sm:$0xff]
        %v955 = vld [vmem:[%s3] sm:$0x1]
        %v957 = vlaneseq
        %v958 = vshrl.u32 %v957, 7
        %v959 = vsub.s32 0, %v958
        %v960 = vrot.slane %v955, %v959
        %v962 = vadd.f32 %v954, %v960
        %963 = vst.msk [vmem:[%s241] sm:$0xff] %vm260, %v962
        %s964 = sand.u32 %s119, 1
        %s965 = scalar_lea.sflag [#allocation5], %s964
        %s966 = sand.u32 %s119, 1
        %s967 = smul.addr %s966, 8
        %s968 = scalar_lea.vmem [#allocation9], %s967
        // Predicated region
        $region49: #{tpu_custom_call.1} parent=35 // pred_check
          %p969 = pneg %p129
        $region50: #{tpu_custom_call.1} parent=35 // pred_check_branch
          %971 = sbr.rel (%p969) target = $region52
        $region51: #{tpu_custom_call.1} parent=35 // pred_region
          %s973 = ssub.s32 128, 128
          %974 = vsyncadd %s965, %s973
          %s975 = smul.addr %s22, 128
          %s976 = scalar_lea.hbm %s4, %s975
          %s978 = sshll.u32 %s968, 4
          %s979 = int_to_ptr.vmem [resolvable:$true] %s978
          %981 = dma.vmem_to_hbm [thread:$0]  %s979, 128, %s976, %s965
        $region52: #{tpu_custom_call.1} parent=35 // pred_fallthru
          _
      $region36: #{tpu_custom_call.1} parent=5 // pred_fallthru
        _
      %p982 = scmp.le.s32.totalorder 2, %s17
      // Predicated region
      $region53: #{tpu_custom_call.1} parent=5 // pred_check
        %p983 = pneg %p982
      $region54: #{tpu_custom_call.1} parent=5 // pred_check_branch
        %985 = sbr.rel (%p983) target = $region56
      $region55: #{tpu_custom_call.1} parent=5 // pred_region
        %s986 = ssub.s32 %s17, 2
        // Predicated region
        $region57: #{tpu_custom_call.1} parent=55 // pred_check
          %p987 = pneg %p135
        $region58: #{tpu_custom_call.1} parent=55 // pred_check_branch
          %989 = sbr.rel (%p987) target = $region60
        $region59: #{tpu_custom_call.1} parent=55 // pred_region
          %s990 = sand.u32 %s120, 1
          %s991 = scalar_lea.sflag [#allocation5], %s990
          %s992 = sand.u32 %s120, 1
          %s993 = smul.addr %s992, 8
          %s994 = scalar_lea.vmem [#allocation9], %s993
          %995 = dma.done %s991, 128
        $region60: #{tpu_custom_call.1} parent=55 // pred_fallthru
          _
      $region56: #{tpu_custom_call.1} parent=5 // pred_fallthru
        _
    $region6: #{tpu_custom_call.1} parent=1 // loop_footer
      %s21 = sadd.s32 1, %s17
    $region7: #{tpu_custom_call.1} parent=1 // loop_footer_branch
      %16 = sbr.rel target = $region3
    $region8: #{tpu_custom_call.1} parent=1 // loop_exit
      _
    %996 = vsyncpa [#allocation4], 1
    %s997 = scalar_lea.sflag [#allocation4], 1
    %998 = vsyncpa %s997, 1
    %999 = vsyncpa [#allocation7], 1
    %1000 = vsyncpa [#allocation5], 1
    %s1001 = scalar_lea.sflag [#allocation5], 1
    %1002 = vsyncpa %s1001, 1

</llo_original>
